<compile_context>
chip_gen: v6e
topology: v6e:2x2x1
jax: 0.10.0
libtpu: 0.0.40
codegen_flags: <defaults>
</compile_context>

<pallas_src>
import math

import jax
import jax.numpy as jnp
from jax.experimental import pallas as pl
from jax.experimental.pallas import tpu as pltpu

# ---- model hyper-params (the "args" of the PyTorch module) -------------------
HIDDEN_DIM = 32          # args.hidden_dim
BATCH = 8                # runtime batch (args.batch_size only feeds unused bn3)
N_CONT = 21              # continuous features
N_CATE = 2               # categorical features per row (Embedding(2, H) lookups)
GOAL = "age"             # -> FFlayer: 128 -> 9, softmax over dim=1
N_OUT = 9 if GOAL == "age" else 1
D_IN = HIDDEN_DIM * 2 + N_CONT   # 85
D_IN_PAD = 128                   # zero-padded K for the first matmul
N_OUT_PAD = 128                  # lane-dense logits / output width
BN_EPS = 1e-5
NEG_BIG = -1e30                  # logit bias for padded output columns

LAYER_DIMS = [(D_IN, 1024), (1024, 512), (512, 256), (256, 128)]

# ---- packed-weight-blob layout (bf16, lane width 512) -------------------------
BLOB_LANES = 512
R_W2 = 0        # rows    0:1024           w2 (1024, 512)
R_W1A = 1024    # rows 1024:1152           w1[:, 0:512]    (K padded 85 -> 128)
R_W1B = 1152    # rows 1152:1280           w1[:, 512:1024]
R_W3 = 1280     # rows 1280:1536           [ w3[0:256,:] | w3[256:512,:] ]
R_W45 = 1536    # rows 1536:1664           [ w4[0:128,:] | w4[128:256,:] | wff | 0 ]
BLOB_ROWS = 1664

# ---- packed-bias layout (f32, one (1, 2048) row) ------------------------------
O_B1, O_B2, O_B3, O_B4, O_BFF = 0, 1024, 1536, 1792, 1920
BIAS_LEN = 2048


# ---- Pallas kernel: fused MLP (BN pre-folded) -> head -> softmax --------------
def health_kernel(xin_ref, wb_ref, bias_ref, out_ref):
    x = xin_ref[...]                                           # (B, 128) bf16

    def mm(a, w):
        return jnp.dot(a, w, preferred_element_type=jnp.float32)

    # layer1: (128, 1024) weight stored as two 512-lane panels -> lane-concat.
    h1 = jnp.concatenate(
        [mm(x, wb_ref[R_W1A:R_W1A + 128, :]),
         mm(x, wb_ref[R_W1B:R_W1B + 128, :])], axis=1)          # (B, 1024) f32
    h1 = jnp.maximum(h1 + bias_ref[:, O_B1:O_B1 + 1024], 0.0).astype(jnp.bfloat16)
    # TODO(synk): Dropout(0.1) is identity in eval mode; training-mode RNG mask omitted.

    # layer2: (1024, 512) weight stored directly.
    h2 = mm(h1, wb_ref[R_W2:R_W2 + 1024, :])                    # (B, 512) f32
    h2 = jnp.maximum(h2 + bias_ref[:, O_B2:O_B2 + 512], 0.0).astype(jnp.bfloat16)

    # layer3: (512, 256) weight K-split into two (256, 256) panels side by side.
    h3 = (mm(h2[:, 0:256], wb_ref[R_W3:R_W3 + 256, 0:256])
          + mm(h2[:, 256:512], wb_ref[R_W3:R_W3 + 256, 256:512]))   # (B, 256)
    h3 = jnp.maximum(h3 + bias_ref[:, O_B3:O_B3 + 256], 0.0).astype(jnp.bfloat16)

    # layer4: (256, 128) weight K-split into two (128, 128) panels side by side.
    h4 = (mm(h3[:, 0:128], wb_ref[R_W45:R_W45 + 128, 0:128])
          + mm(h3[:, 128:256], wb_ref[R_W45:R_W45 + 128, 128:256]))  # (B, 128)
    h4 = jnp.maximum(h4 + bias_ref[:, O_B4:O_B4 + 128], 0.0).astype(jnp.bfloat16)

    # head + softmax; padded columns carry -1e30 bias (f32) -> exp == 0.
    logits = (mm(h4, wb_ref[R_W45:R_W45 + 128, 256:384])
              + bias_ref[:, O_BFF:O_BFF + 128])                 # (B, 128) f32
    m = jnp.max(logits, axis=1, keepdims=True)
    e = jnp.exp(logits - m)
    out_ref[...] = e / jnp.sum(e, axis=1, keepdims=True)


# ---- parameter construction (deterministic, PyTorch-default-style) -----------
def make_params(key):
    params = {}
    keys = jax.random.split(key, 8)

    params["emb"] = jax.random.normal(keys[0], (2, HIDDEN_DIM), jnp.float32)  # nn.Embedding(2, H)

    # BatchNorm running stats / affine: PyTorch defaults (fresh module, eval mode)
    def bn_fold(dim):
        gamma = jnp.ones((dim,), jnp.float32)
        beta = jnp.zeros((dim,), jnp.float32)
        mean = jnp.zeros((dim,), jnp.float32)
        var = jnp.ones((dim,), jnp.float32)
        scale = gamma / jnp.sqrt(var + BN_EPS)
        shift = beta - mean * scale
        return scale, shift

    params["bn1"] = bn_fold(HIDDEN_DIM * 2)
    params["bn2"] = bn_fold(N_CONT)
    # bn3 exists in __init__ but is never used in forward() -> not constructed.

    def linear(k, fan_in, fan_out):
        k1, k2 = jax.random.split(k)
        bound = 1.0 / math.sqrt(fan_in)
        w = jax.random.uniform(k1, (fan_in, fan_out), jnp.float32, -bound, bound)
        b = jax.random.uniform(k2, (fan_out,), jnp.float32, -bound, bound)
        return w, b

    for i, (fi, fo) in enumerate(LAYER_DIMS, start=1):
        w, b = linear(keys[i], fi, fo)
        s, t = bn_fold(fo)
        params[f"layer{i}"] = (w, b, s, t)

    params["ff"] = linear(keys[5], 128, N_OUT)
    return params


def fold_params(params):
    """Fold eval-mode BatchNorm affines into the linears, then pack every weight
    matrix into a single bf16 (1664, 512) blob and every bias into one f32
    (1, 2048) row so the kernel needs exactly one weight DMA and one bias DMA."""
    s_in = jnp.concatenate([params["bn1"][0], params["bn2"][0]])   # (85,)
    t_in = jnp.concatenate([params["bn1"][1], params["bn2"][1]])   # (85,)

    w1, b1, s1, t1 = params["layer1"]
    # input BN:  (x*s_in + t_in) @ W1 + b1 = x @ (diag(s_in) W1) + (t_in @ W1 + b1)
    w1f = (s_in[:, None] * w1) * s1[None, :]
    b1f = (t_in @ w1 + b1) * s1 + t1
    w1f = jnp.pad(w1f, ((0, D_IN_PAD - D_IN), (0, 0)))             # (128, 1024)

    def fold(i):
        w, b, s, t = params[f"layer{i}"]
        return w * s[None, :], b * s + t

    w2f, b2f = fold(2)                                             # (1024, 512)
    w3f, b3f = fold(3)                                             # (512, 256)
    w4f, b4f = fold(4)                                             # (256, 128)

    wff, bff = params["ff"]
    wffp = jnp.pad(wff, ((0, 0), (0, N_OUT_PAD - N_OUT)))          # (128, 128)
    bffp = jnp.full((N_OUT_PAD,), NEG_BIG, jnp.float32).at[:N_OUT].set(bff)

    blob = jnp.zeros((BLOB_ROWS, BLOB_LANES), jnp.float32)
    blob = blob.at[R_W2:R_W2 + 1024, :].set(w2f)
    blob = blob.at[R_W1A:R_W1A + 128, :].set(w1f[:, 0:512])
    blob = blob.at[R_W1B:R_W1B + 128, :].set(w1f[:, 512:1024])
    blob = blob.at[R_W3:R_W3 + 256, 0:256].set(w3f[0:256, :])
    blob = blob.at[R_W3:R_W3 + 256, 256:512].set(w3f[256:512, :])
    blob = blob.at[R_W45:R_W45 + 128, 0:128].set(w4f[0:128, :])
    blob = blob.at[R_W45:R_W45 + 128, 128:256].set(w4f[128:256, :])
    blob = blob.at[R_W45:R_W45 + 128, 256:384].set(wffp)
    # TODO(synk): int8 (v5e/v6e) or fp8-e4m3 (v7x) weight quantization with
    # per-channel scales folded into the BN scale would halve this blob again.

    biases = jnp.concatenate([b1f, b2f, b3f, b4f, bffp])[None, :]  # (1, 2048) f32
    assert biases.shape[1] == BIAS_LEN

    return {"wblob": blob.astype(jnp.bfloat16), "bias": biases}


# ---- wrapper: glue (gather / concat / padding) + pallas_call ------------------
def health_forward(cont, cate, params, folded=None):
    if folded is None:
        folded = fold_params(params)

    B = cate.shape[0]
    B_pad = max(8, ((B + 7) // 8) * 8)   # sublane-aligned batch

    # embedding lookup + reshape(B, 2H) (pure gather/layout glue)
    x1 = params["emb"][cate].reshape(B, HIDDEN_DIM * 2)
    xin = jnp.concatenate([x1, cont.astype(jnp.float32)], axis=1)          # (B, 85)
    xin = jnp.pad(xin, ((0, B_pad - B), (0, D_IN_PAD - D_IN)))             # (B_pad, 128)
    xin = xin.astype(jnp.bfloat16)                                         # matmul operand dtype

    vmem = pl.BlockSpec(memory_space=pltpu.MemorySpace.VMEM)

    flops = 2 * B_pad * sum(fi * fo for fi, fo in
                            [(D_IN_PAD, 1024), (1024, 512), (512, 256),
                             (256, 128), (128, N_OUT_PAD)])
    bytes_accessed = (int(folded["wblob"].size) * 2 + int(folded["bias"].size) * 4
                      + int(xin.size) * 2 + B_pad * N_OUT_PAD * 4)

    out = pl.pallas_call(
        health_kernel,
        out_shape=jax.ShapeDtypeStruct((B_pad, N_OUT_PAD), jnp.float32),
        in_specs=[vmem, vmem, vmem],
        out_specs=vmem,
        compiler_params=pltpu.CompilerParams(vmem_limit_bytes=8 * 1024 * 1024),
        cost_estimate=pl.CostEstimate(
            flops=int(flops),
            transcendentals=int(B_pad * N_OUT_PAD),
            bytes_accessed=int(bytes_accessed)),
    )(xin, folded["wblob"], folded["bias"])
    # TODO(synk): for a serving loop, keep folded["wblob"] VMEM-resident across
    # calls (cross-pallas_call future, pattern P10) instead of re-streaming it.
    return out[:B, :N_OUT]


# ---- plain-JAX f32 reference for correctness check ----------------------------
def health_forward_ref(cont, cate, params):
    B = cate.shape[0]
    x1 = params["emb"][cate].reshape(B, HIDDEN_DIM * 2)
    x1 = x1 * params["bn1"][0] + params["bn1"][1]
    x2 = cont * params["bn2"][0] + params["bn2"][1]
    x = jnp.concatenate([x1, x2], axis=1)
    for i in range(1, 5):
        w, b, s, t = params[f"layer{i}"]
        x = jnp.maximum((x @ w + b) * s + t, 0.0)
    wff, bff = params["ff"]
    return jax.nn.softmax(x @ wff + bff, axis=1)


if __name__ == "__main__":
    key = jax.random.PRNGKey(0)
    kp, kc, ki = jax.random.split(key, 3)

    params = make_params(kp)
    cont = jax.random.normal(kc, (BATCH, N_CONT), jnp.float32)          # continuous features
    cate = jax.random.randint(ki, (BATCH, N_CATE), 0, 2, jnp.int32)     # categorical indices in {0,1}

    out = jax.block_until_ready(health_forward(cont, cate, params))
    ref = health_forward_ref(cont, cate, params)

    assert out.shape == (BATCH, N_OUT)
    # bf16 weight/input streaming -> loosened tolerance vs f32 reference
    assert jnp.allclose(out, ref, atol=2e-2, rtol=2e-2), "Pallas output mismatch vs reference"
    # exact softmax divide in-kernel -> rows sum to 1 to f32 accuracy
    assert jnp.allclose(jnp.sum(out, axis=1), 1.0, atol=1e-4), "softmax rows must sum to 1"

    print("KERNEL_OK")
</pallas_src>

<mosaic_0001>
module attributes {stable_mosaic.version = 11 : i64} {
  func.func @health_kernel(%arg0: memref<8x128xbf16, #tpu.memory_space<vmem>>, %arg1: memref<1664x512xbf16, #tpu.memory_space<vmem>>, %arg2: memref<1x2048xf32, #tpu.memory_space<vmem>>, %arg3: memref<8x128xf32, #tpu.memory_space<vmem>>) attributes {dimension_semantics = [], scalar_prefetch = 0 : i64, scratch_operands = 0 : i64, tpu.core_type = #tpu.core_type<tc>} {
    %c0 = arith.constant 0 : index
    %c0_0 = arith.constant 0 : index
    %0 = vector.load %arg0[%c0, %c0_0] : memref<8x128xbf16, #tpu.memory_space<vmem>>, vector<8x128xbf16>
    %c1024 = arith.constant 1024 : index
    %c0_1 = arith.constant 0 : index
    %1 = vector.load %arg1[%c1024, %c0_1] : memref<1664x512xbf16, #tpu.memory_space<vmem>>, vector<128x512xbf16>
    %cst = arith.constant dense<0.000000e+00> : vector<8x512xf32>
    %2 = tpu.matmul %0, %1, %cst {dimension_numbers = #tpu.dot_dimension_numbers<[1], [0], [0], [1], [0, 0, 1, 1], [], []>} : vector<8x128xbf16>, vector<128x512xbf16>, vector<8x512xf32> -> vector<8x512xf32>
    %c1152 = arith.constant 1152 : index
    %c0_2 = arith.constant 0 : index
    %3 = vector.load %arg1[%c1152, %c0_2] : memref<1664x512xbf16, #tpu.memory_space<vmem>>, vector<128x512xbf16>
    %cst_3 = arith.constant dense<0.000000e+00> : vector<8x512xf32>
    %4 = tpu.matmul %0, %3, %cst_3 {dimension_numbers = #tpu.dot_dimension_numbers<[1], [0], [0], [1], [0, 0, 1, 1], [], []>} : vector<8x128xbf16>, vector<128x512xbf16>, vector<8x512xf32> -> vector<8x512xf32>
    %5 = tpu.concatenate %2, %4 in 1 : vector<8x512xf32>, vector<8x512xf32> -> vector<8x1024xf32>
    %c0_4 = arith.constant 0 : index
    %c0_5 = arith.constant 0 : index
    %6 = vector.load %arg2[%c0_4, %c0_5] : memref<1x2048xf32, #tpu.memory_space<vmem>>, vector<1x1024xf32>
    %7 = vector.broadcast %6 : vector<1x1024xf32> to vector<8x1024xf32>
    %8 = arith.addf %5, %7 : vector<8x1024xf32>
    %cst_6 = arith.constant 0.000000e+00 : f32
    %9 = vector.broadcast %cst_6 : f32 to vector<8x1024xf32>
    %10 = arith.maximumf %8, %9 : vector<8x1024xf32>
    %11 = arith.truncf %10 : vector<8x1024xf32> to vector<8x1024xbf16>
    %c0_7 = arith.constant 0 : index
    %c0_8 = arith.constant 0 : index
    %12 = vector.load %arg1[%c0_7, %c0_8] : memref<1664x512xbf16, #tpu.memory_space<vmem>>, vector<1024x512xbf16>
    %cst_9 = arith.constant dense<0.000000e+00> : vector<8x512xf32>
    %13 = tpu.matmul %11, %12, %cst_9 {dimension_numbers = #tpu.dot_dimension_numbers<[1], [0], [0], [1], [0, 0, 1, 1], [], []>} : vector<8x1024xbf16>, vector<1024x512xbf16>, vector<8x512xf32> -> vector<8x512xf32>
    %c0_10 = arith.constant 0 : index
    %c1024_11 = arith.constant 1024 : index
    %14 = vector.load %arg2[%c0_10, %c1024_11] : memref<1x2048xf32, #tpu.memory_space<vmem>>, vector<1x512xf32>
    %15 = vector.broadcast %14 : vector<1x512xf32> to vector<8x512xf32>
    %16 = arith.addf %13, %15 : vector<8x512xf32>
    %cst_12 = arith.constant 0.000000e+00 : f32
    %17 = vector.broadcast %cst_12 : f32 to vector<8x512xf32>
    %18 = arith.maximumf %16, %17 : vector<8x512xf32>
    %19 = arith.truncf %18 : vector<8x512xf32> to vector<8x512xbf16>
    %20 = vector.extract_strided_slice %19 {offsets = [0, 0], sizes = [8, 256], strides = [1, 1]} : vector<8x512xbf16> to vector<8x256xbf16>
    %c1280 = arith.constant 1280 : index
    %c0_13 = arith.constant 0 : index
    %21 = vector.load %arg1[%c1280, %c0_13] : memref<1664x512xbf16, #tpu.memory_space<vmem>>, vector<256x256xbf16>
    %cst_14 = arith.constant dense<0.000000e+00> : vector<8x256xf32>
    %22 = tpu.matmul %20, %21, %cst_14 {dimension_numbers = #tpu.dot_dimension_numbers<[1], [0], [0], [1], [0, 0, 1, 1], [], []>} : vector<8x256xbf16>, vector<256x256xbf16>, vector<8x256xf32> -> vector<8x256xf32>
    %23 = vector.extract_strided_slice %19 {offsets = [0, 256], sizes = [8, 256], strides = [1, 1]} : vector<8x512xbf16> to vector<8x256xbf16>
    %c1280_15 = arith.constant 1280 : index
    %c256 = arith.constant 256 : index
    %24 = vector.load %arg1[%c1280_15, %c256] : memref<1664x512xbf16, #tpu.memory_space<vmem>>, vector<256x256xbf16>
    %cst_16 = arith.constant dense<0.000000e+00> : vector<8x256xf32>
    %25 = tpu.matmul %23, %24, %cst_16 {dimension_numbers = #tpu.dot_dimension_numbers<[1], [0], [0], [1], [0, 0, 1, 1], [], []>} : vector<8x256xbf16>, vector<256x256xbf16>, vector<8x256xf32> -> vector<8x256xf32>
    %26 = arith.addf %22, %25 : vector<8x256xf32>
    %c0_17 = arith.constant 0 : index
    %c1536 = arith.constant 1536 : index
    %27 = vector.load %arg2[%c0_17, %c1536] : memref<1x2048xf32, #tpu.memory_space<vmem>>, vector<1x256xf32>
    %28 = vector.broadcast %27 : vector<1x256xf32> to vector<8x256xf32>
    %29 = arith.addf %26, %28 : vector<8x256xf32>
    %cst_18 = arith.constant 0.000000e+00 : f32
    %30 = vector.broadcast %cst_18 : f32 to vector<8x256xf32>
    %31 = arith.maximumf %29, %30 : vector<8x256xf32>
    %32 = arith.truncf %31 : vector<8x256xf32> to vector<8x256xbf16>
    %33 = vector.extract_strided_slice %32 {offsets = [0, 0], sizes = [8, 128], strides = [1, 1]} : vector<8x256xbf16> to vector<8x128xbf16>
    %c1536_19 = arith.constant 1536 : index
    %c0_20 = arith.constant 0 : index
    %34 = vector.load %arg1[%c1536_19, %c0_20] : memref<1664x512xbf16, #tpu.memory_space<vmem>>, vector<128x128xbf16>
    %cst_21 = arith.constant dense<0.000000e+00> : vector<8x128xf32>
    %35 = tpu.matmul %33, %34, %cst_21 {dimension_numbers = #tpu.dot_dimension_numbers<[1], [0], [0], [1], [0, 0, 1, 1], [], []>} : vector<8x128xbf16>, vector<128x128xbf16>, vector<8x128xf32> -> vector<8x128xf32>
    %36 = vector.extract_strided_slice %32 {offsets = [0, 128], sizes = [8, 128], strides = [1, 1]} : vector<8x256xbf16> to vector<8x128xbf16>
    %c1536_22 = arith.constant 1536 : index
    %c128 = arith.constant 128 : index
    %37 = vector.load %arg1[%c1536_22, %c128] : memref<1664x512xbf16, #tpu.memory_space<vmem>>, vector<128x128xbf16>
    %cst_23 = arith.constant dense<0.000000e+00> : vector<8x128xf32>
    %38 = tpu.matmul %36, %37, %cst_23 {dimension_numbers = #tpu.dot_dimension_numbers<[1], [0], [0], [1], [0, 0, 1, 1], [], []>} : vector<8x128xbf16>, vector<128x128xbf16>, vector<8x128xf32> -> vector<8x128xf32>
    %39 = arith.addf %35, %38 : vector<8x128xf32>
    %c0_24 = arith.constant 0 : index
    %c1792 = arith.constant 1792 : index
    %40 = vector.load %arg2[%c0_24, %c1792] : memref<1x2048xf32, #tpu.memory_space<vmem>>, vector<1x128xf32>
    %41 = vector.broadcast %40 : vector<1x128xf32> to vector<8x128xf32>
    %42 = arith.addf %39, %41 : vector<8x128xf32>
    %cst_25 = arith.constant 0.000000e+00 : f32
    %43 = vector.broadcast %cst_25 : f32 to vector<8x128xf32>
    %44 = arith.maximumf %42, %43 : vector<8x128xf32>
    %45 = arith.truncf %44 : vector<8x128xf32> to vector<8x128xbf16>
    %c1536_26 = arith.constant 1536 : index
    %c256_27 = arith.constant 256 : index
    %46 = vector.load %arg1[%c1536_26, %c256_27] : memref<1664x512xbf16, #tpu.memory_space<vmem>>, vector<128x128xbf16>
    %cst_28 = arith.constant dense<0.000000e+00> : vector<8x128xf32>
    %47 = tpu.matmul %45, %46, %cst_28 {dimension_numbers = #tpu.dot_dimension_numbers<[1], [0], [0], [1], [0, 0, 1, 1], [], []>} : vector<8x128xbf16>, vector<128x128xbf16>, vector<8x128xf32> -> vector<8x128xf32>
    %c0_29 = arith.constant 0 : index
    %c1920 = arith.constant 1920 : index
    %48 = vector.load %arg2[%c0_29, %c1920] : memref<1x2048xf32, #tpu.memory_space<vmem>>, vector<1x128xf32>
    %49 = vector.broadcast %48 : vector<1x128xf32> to vector<8x128xf32>
    %50 = arith.addf %47, %49 : vector<8x128xf32>
    %cst_30 = arith.constant dense<0xFF800000> : vector<8xf32>
    %51 = vector.multi_reduction <maximumf>, %50, %cst_30 [1] : vector<8x128xf32> to vector<8xf32>
    %52 = vector.shape_cast %51 : vector<8xf32> to vector<8x1xf32>
    %53 = vector.broadcast %52 : vector<8x1xf32> to vector<8x128xf32>
    %54 = arith.subf %50, %53 : vector<8x128xf32>
    %55 = math.exp %54 : vector<8x128xf32>
    %cst_31 = arith.constant dense<0.000000e+00> : vector<8xf32>
    %56 = vector.multi_reduction <add>, %55, %cst_31 [1] : vector<8x128xf32> to vector<8xf32>
    %57 = vector.shape_cast %56 : vector<8xf32> to vector<8x1xf32>
    %58 = vector.broadcast %57 : vector<8x1xf32> to vector<8x128xf32>
    %59 = arith.divf %55, %58 : vector<8x128xf32>
    %c0_32 = arith.constant 0 : index
    %c0_33 = arith.constant 0 : index
    %60 = vector.load %arg3[%c0_32, %c0_33] : memref<8x128xf32, #tpu.memory_space<vmem>>, vector<8x128xf32>
    tpu.vector_store %arg3[%c0_32, %c0_33], %59 {strides = array<i32>} : memref<8x128xf32, #tpu.memory_space<vmem>>, vector<8x128xf32>,
    return
  }
}

</mosaic_0001>

<llo_original>
// kernel: tpu_custom_call.1
$region0: #{tpu_custom_call.1}
  #allocation0 [shape = 'u32[]', space=smem, size = 0x4, offset = 0x4, fixed_abs, tag = 'smem constant byte address 0x4 - core index']
  #allocation1 [shape = 'u32[144,128]{1,0:T(1,128)}', space=vmem, size = 0x12000, scoped, tag = 'internal scratch']
  %s0 = inlined_call_operand.hbm [shape: bf16[8,128], index: 0, kind: input, shape index: {}]
  %s1 = inlined_call_operand.hbm [shape: bf16[1664,512], index: 1, kind: input, shape index: {}]
  %s2 = inlined_call_operand.hbm [shape: f32[1,2048], index: 2, kind: input, shape index: {}]
  %s3 = inlined_call_operand.hbm [shape: f32[8,128], index: 3, kind: output, shape index: {}]
  %s4 = sld [smem:[#allocation0]]
  $region34: #{tpu_custom_call.1} parent=0
    _
  %s6 = ssub.s32 1, %s4
  %s7 = scalar_select 0, %s6, %s4
  $region1: #{tpu_custom_call.1} parent=0
    #allocation2 [shape = 'u8[2048]{0}', space=vmem, size = 0x800, scoped, tag = 'input window, operand 0, single buffered']
    #allocation3 [shape = 's32[1]{0}', space=sflag, size = 0x4, scoped, tag = 'scoped memory for tpu_custom_call.1']
    #allocation4 [shape = 's32[1]{0}', space=sflag, size = 0x4, scoped, tag = 'scoped memory for tpu_custom_call.1']
    #allocation5 [shape = 'u8[1703936]{0}', space=vmem, size = 0x1a0000, scoped, tag = 'input window, operand 1, single buffered']
    #allocation6 [shape = 's32[1]{0}', space=sflag, size = 0x4, scoped, tag = 'scoped memory for tpu_custom_call.1']
    #allocation7 [shape = 'u8[8192]{0}', space=vmem, size = 0x2000, scoped, tag = 'input window, operand 2, single buffered']
    #allocation8 [shape = 'u8[4096]{0}', space=vmem, size = 0x1000, scoped, tag = 'output window, operand 0, single buffered']
    %8 = vsyncpa [#allocation3], 0
    %9 = vsyncpa [#allocation6], 0
    %10 = vsyncpa [#allocation4], 0
    // Predicated region
    $region2: #{tpu_custom_call.1} parent=1 // pred_check
      _
    $region3: #{tpu_custom_call.1} parent=1 // pred_check_branch
      %12 = sbr.rel (0) target = $region5
    $region4: #{tpu_custom_call.1} parent=1 // pred_region
      %s14 = ssub.s32 64, 64
      %15 = vsyncadd [#allocation3], %s14
      %s17 = sshll.u32 [#allocation2], 4
      %s18 = int_to_ptr.vmem [resolvable:$true] %s17
      %20 = dma.hbm_to_vmem [thread:$0]  %s0, 64, %s18, [#allocation3]
    $region5: #{tpu_custom_call.1} parent=1 // pred_fallthru
      _
    // Predicated region
    $region6: #{tpu_custom_call.1} parent=1 // pred_check
      _
    $region7: #{tpu_custom_call.1} parent=1 // pred_check_branch
      %22 = sbr.rel (0) target = $region9
    $region8: #{tpu_custom_call.1} parent=1 // pred_region
      %s24 = ssub.s32 53248, 53248
      %25 = vsyncadd [#allocation6], %s24
      %s26 = sshll.u32 [#allocation5], 4
      %s27 = int_to_ptr.vmem [resolvable:$true] %s26
      %32 = dma.hbm_to_vmem [thread:$0]  %s1, 53248, %s27, [#allocation6], 256, 256, 16
    $region9: #{tpu_custom_call.1} parent=1 // pred_fallthru
      _
    // Predicated region
    $region10: #{tpu_custom_call.1} parent=1 // pred_check
      _
    $region11: #{tpu_custom_call.1} parent=1 // pred_check_branch
      %34 = sbr.rel (0) target = $region13
    $region12: #{tpu_custom_call.1} parent=1 // pred_region
      %s36 = ssub.s32 256, 256
      %37 = vsyncadd [#allocation6], %s36
      %s39 = sshll.u32 [#allocation7], 4
      %s40 = int_to_ptr.vmem [resolvable:$true] %s39
      %42 = dma.hbm_to_vmem [thread:$0]  %s2, 256, %s40, [#allocation6]
    $region13: #{tpu_custom_call.1} parent=1 // pred_fallthru
      _
    // Predicated region
    $region14: #{tpu_custom_call.1} parent=1 // pred_check
      _
    $region15: #{tpu_custom_call.1} parent=1 // pred_check_branch
      %44 = sbr.rel (0) target = $region17
    $region16: #{tpu_custom_call.1} parent=1 // pred_region
      %45 = dma.done [#allocation3], 64
    $region17: #{tpu_custom_call.1} parent=1 // pred_fallthru
      _
    // Predicated region
    $region18: #{tpu_custom_call.1} parent=1 // pred_check
      _
    $region19: #{tpu_custom_call.1} parent=1 // pred_check_branch
      %47 = sbr.rel (0) target = $region21
    $region20: #{tpu_custom_call.1} parent=1 // pred_region
      %48 = dma.done [#allocation6], 53248
    $region21: #{tpu_custom_call.1} parent=1 // pred_fallthru
      _
    // Predicated region
    $region22: #{tpu_custom_call.1} parent=1 // pred_check
      _
    $region23: #{tpu_custom_call.1} parent=1 // pred_check_branch
      %50 = sbr.rel (0) target = $region25
    $region24: #{tpu_custom_call.1} parent=1 // pred_region
      %51 = dma.done [#allocation6], 256
    $region25: #{tpu_custom_call.1} parent=1 // pred_fallthru
      _
    %v53 = vld [vmem:[#allocation2] sm:$0xf]
    %v54 = vld [vmem:[#allocation5 + $0x800] sm:$0xff]
    %v55 = vld [vmem:[#allocation5 + $0x808] sm:$0xff]
    %v56 = vld [vmem:[#allocation5 + $0x810] sm:$0xff]
    %v57 = vld [vmem:[#allocation5 + $0x818] sm:$0xff]
    %v58 = vld [vmem:[#allocation5 + $0x820] sm:$0xff]
    %v59 = vld [vmem:[#allocation5 + $0x828] sm:$0xff]
    %v60 = vld [vmem:[#allocation5 + $0x830] sm:$0xff]
    %v61 = vld [vmem:[#allocation5 + $0x838] sm:$0xff]
    %v62 = vld [vmem:[#allocation5 + $0x840] sm:$0xff]
    %v63 = vld [vmem:[#allocation5 + $0x848] sm:$0xff]
    %v64 = vld [vmem:[#allocation5 + $0x850] sm:$0xff]
    %v65 = vld [vmem:[#allocation5 + $0x858] sm:$0xff]
    %v66 = vld [vmem:[#allocation5 + $0x860] sm:$0xff]
    %v67 = vld [vmem:[#allocation5 + $0x868] sm:$0xff]
    %v68 = vld [vmem:[#allocation5 + $0x870] sm:$0xff]
    %v69 = vld [vmem:[#allocation5 + $0x878] sm:$0xff]
    %v70 = vld [vmem:[#allocation5 + $0x880] sm:$0xff]
    %v71 = vld [vmem:[#allocation5 + $0x888] sm:$0xff]
    %v72 = vld [vmem:[#allocation5 + $0x890] sm:$0xff]
    %v73 = vld [vmem:[#allocation5 + $0x898] sm:$0xff]
    %v74 = vld [vmem:[#allocation5 + $0x8a0] sm:$0xff]
    %v75 = vld [vmem:[#allocation5 + $0x8a8] sm:$0xff]
    %v76 = vld [vmem:[#allocation5 + $0x8b0] sm:$0xff]
    %v77 = vld [vmem:[#allocation5 + $0x8b8] sm:$0xff]
    %v78 = vld [vmem:[#allocation5 + $0x8c0] sm:$0xff]
    %v79 = vld [vmem:[#allocation5 + $0x8c8] sm:$0xff]
    %v80 = vld [vmem:[#allocation5 + $0x8d0] sm:$0xff]
    %v81 = vld [vmem:[#allocation5 + $0x8d8] sm:$0xff]
    %v82 = vld [vmem:[#allocation5 + $0x8e0] sm:$0xff]
    %v83 = vld [vmem:[#allocation5 + $0x8e8] sm:$0xff]
    %v84 = vld [vmem:[#allocation5 + $0x8f0] sm:$0xff]
    %v85 = vld [vmem:[#allocation5 + $0x8f8] sm:$0xff]
    %v118 = vunpack.c.l.b16 %v54
    %v119 = vunpack.c.h.b16 %v54
    %v120 = vunpack.c.l.b16 %v55
    %v121 = vunpack.c.h.b16 %v55
    %v122 = vunpack.c.l.b16 %v56
    %v123 = vunpack.c.h.b16 %v56
    %v124 = vunpack.c.l.b16 %v57
    %v125 = vunpack.c.h.b16 %v57
    %v126 = vunpack.c.l.b16 %v58
    %v127 = vunpack.c.h.b16 %v58
    %v128 = vunpack.c.l.b16 %v59
    %v129 = vunpack.c.h.b16 %v59
    %v130 = vunpack.c.l.b16 %v60
    %v131 = vunpack.c.h.b16 %v60
    %v132 = vunpack.c.l.b16 %v61
    %v133 = vunpack.c.h.b16 %v61
    %v134 = vunpack.c.l.b16 %v62
    %v135 = vunpack.c.h.b16 %v62
    %v136 = vunpack.c.l.b16 %v63
    %v137 = vunpack.c.h.b16 %v63
    %v138 = vunpack.c.l.b16 %v64
    %v139 = vunpack.c.h.b16 %v64
    %v140 = vunpack.c.l.b16 %v65
    %v141 = vunpack.c.h.b16 %v65
    %v142 = vunpack.c.l.b16 %v66
    %v143 = vunpack.c.h.b16 %v66
    %v144 = vunpack.c.l.b16 %v67
    %v145 = vunpack.c.h.b16 %v67
    %v146 = vunpack.c.l.b16 %v68
    %v147 = vunpack.c.h.b16 %v68
    %v148 = vunpack.c.l.b16 %v69
    %v149 = vunpack.c.h.b16 %v69
    %v150 = vunpack.c.l.b16 %v70
    %v151 = vunpack.c.h.b16 %v70
    %v152 = vunpack.c.l.b16 %v71
    %v153 = vunpack.c.h.b16 %v71
    %v154 = vunpack.c.l.b16 %v72
    %v155 = vunpack.c.h.b16 %v72
    %v156 = vunpack.c.l.b16 %v73
    %v157 = vunpack.c.h.b16 %v73
    %v158 = vunpack.c.l.b16 %v74
    %v159 = vunpack.c.h.b16 %v74
    %v160 = vunpack.c.l.b16 %v75
    %v161 = vunpack.c.h.b16 %v75
    %v162 = vunpack.c.l.b16 %v76
    %v163 = vunpack.c.h.b16 %v76
    %v164 = vunpack.c.l.b16 %v77
    %v165 = vunpack.c.h.b16 %v77
    %v166 = vunpack.c.l.b16 %v78
    %v167 = vunpack.c.h.b16 %v78
    %v168 = vunpack.c.l.b16 %v79
    %v169 = vunpack.c.h.b16 %v79
    %v170 = vunpack.c.l.b16 %v80
    %v171 = vunpack.c.h.b16 %v80
    %v172 = vunpack.c.l.b16 %v81
    %v173 = vunpack.c.h.b16 %v81
    %v174 = vunpack.c.l.b16 %v82
    %v175 = vunpack.c.h.b16 %v82
    %v176 = vunpack.c.l.b16 %v83
    %v177 = vunpack.c.h.b16 %v83
    %v178 = vunpack.c.l.b16 %v84
    %v179 = vunpack.c.h.b16 %v84
    %v180 = vunpack.c.l.b16 %v85
    %v181 = vunpack.c.h.b16 %v85
    %v182 = vpack.c.b16 %v122, %v118
    %v183 = vpack.c.b16 %v123, %v119
    %v184 = vpack.c.b16 %v124, %v120
    %v185 = vpack.c.b16 %v125, %v121
    %v186 = vpack.c.b16 %v130, %v126
    %v187 = vpack.c.b16 %v131, %v127
    %v188 = vpack.c.b16 %v132, %v128
    %v189 = vpack.c.b16 %v133, %v129
    %v190 = vpack.c.b16 %v138, %v134
    %v191 = vpack.c.b16 %v139, %v135
    %v192 = vpack.c.b16 %v140, %v136
    %v193 = vpack.c.b16 %v141, %v137
    %v194 = vpack.c.b16 %v146, %v142
    %v195 = vpack.c.b16 %v147, %v143
    %v196 = vpack.c.b16 %v148, %v144
    %v197 = vpack.c.b16 %v149, %v145
    %v198 = vpack.c.b16 %v154, %v150
    %v199 = vpack.c.b16 %v155, %v151
    %v200 = vpack.c.b16 %v156, %v152
    %v201 = vpack.c.b16 %v157, %v153
    %v202 = vpack.c.b16 %v162, %v158
    %v203 = vpack.c.b16 %v163, %v159
    %v204 = vpack.c.b16 %v164, %v160
    %v205 = vpack.c.b16 %v165, %v161
    %v206 = vpack.c.b16 %v170, %v166
    %v207 = vpack.c.b16 %v171, %v167
    %v208 = vpack.c.b16 %v172, %v168
    %v209 = vpack.c.b16 %v173, %v169
    %v210 = vpack.c.b16 %v178, %v174
    %v211 = vpack.c.b16 %v179, %v175
    %v212 = vpack.c.b16 %v180, %v176
    %v213 = vpack.c.b16 %v181, %v177
    %246 = vmatprep.subr.bf16.mxu0 %v211
    %247 = vmatpush1.bf16.msra.mxu0 %v210
    %248 = vmatprep.subr.bf16.mxu0 %v207
    %249 = vmatpush1.bf16.msra.mxu0 %v206
    %250 = vmatprep.subr.bf16.mxu0 %v203
    %251 = vmatpush1.bf16.msra.mxu0 %v202
    %252 = vmatprep.subr.bf16.mxu0 %v199
    %253 = vmatpush1.bf16.msra.mxu0 %v198
    %254 = vmatprep.subr.bf16.mxu0 %v195
    %255 = vmatpush1.bf16.msra.mxu0 %v194
    %256 = vmatprep.subr.bf16.mxu0 %v191
    %257 = vmatpush1.bf16.msra.mxu0 %v190
    %258 = vmatprep.subr.bf16.mxu0 %v187
    %259 = vmatpush1.bf16.msra.mxu0 %v186
    %260 = vmatprep.subr.bf16.mxu0 %v183
    %261 = vmatpush1.bf16.msra.mxu0 %v182
    %262 = vmatprep.subr.bf16.mxu0 0
    %263 = vmatpush2.bf16.msra.mxu0 0
    %264 = vmatprep.subr.bf16.mxu0 0
    %265 = vmatpush2.bf16.msra.mxu0 0
    %266 = vmatprep.subr.bf16.mxu0 0
    %267 = vmatpush2.bf16.msra.mxu0 0
    %268 = vmatprep.subr.bf16.mxu0 0
    %269 = vmatpush2.bf16.msra.mxu0 0
    %270 = vmatprep.subr.bf16.mxu0 0
    %271 = vmatpush2.bf16.msra.mxu0 0
    %272 = vmatprep.subr.bf16.mxu0 0
    %273 = vmatpush2.bf16.msra.mxu0 0
    %274 = vmatprep.subr.bf16.mxu0 0
    %275 = vmatpush2.bf16.msra.mxu0 0
    %276 = vmatprep.subr.bf16.mxu0 0
    %277 = vmatpush2.bf16.msra.mxu0 0
    %278 = vmatprep.mubr.bf16.mxu0 0
    %279 = vmatmul.mubr.bf16.gmra.mxu0 %v53
    %v280 = vpop.f32.mrf.mxu0
    %v281 = vadd.f32 0.0, %v280
    %v282 = vpop.f32.mrf.mxu0
    %v283 = vadd.f32 0.0, %v282
    %v284 = vpop.f32.mrf.mxu0
    %v285 = vpop.f32.mrf.mxu0
    %286 = vdwg.mxu0
    %287 = vmatprep.subr.bf16.mxu0 %v213
    %288 = vmatpush1.bf16.msra.mxu0 %v212
    %289 = vmatprep.subr.bf16.mxu0 %v209
    %290 = vmatpush1.bf16.msra.mxu0 %v208
    %291 = vmatprep.subr.bf16.mxu0 %v205
    %292 = vmatpush1.bf16.msra.mxu0 %v204
    %293 = vmatprep.subr.bf16.mxu0 %v201
    %294 = vmatpush1.bf16.msra.mxu0 %v200
    %295 = vmatprep.subr.bf16.mxu0 %v197
    %296 = vmatpush1.bf16.msra.mxu0 %v196
    %297 = vmatprep.subr.bf16.mxu0 %v193
    %298 = vmatpush1.bf16.msra.mxu0 %v192
    %299 = vmatprep.subr.bf16.mxu0 %v189
    %300 = vmatpush1.bf16.msra.mxu0 %v188
    %301 = vmatprep.subr.bf16.mxu0 %v185
    %302 = vmatpush1.bf16.msra.mxu0 %v184
    %303 = vmatprep.subr.bf16.mxu0 0
    %304 = vmatpush2.bf16.msra.mxu0 0
    %305 = vmatprep.subr.bf16.mxu0 0
    %306 = vmatpush2.bf16.msra.mxu0 0
    %307 = vmatprep.subr.bf16.mxu0 0
    %308 = vmatpush2.bf16.msra.mxu0 0
    %309 = vmatprep.subr.bf16.mxu0 0
    %310 = vmatpush2.bf16.msra.mxu0 0
    %311 = vmatprep.subr.bf16.mxu0 0
    %312 = vmatpush2.bf16.msra.mxu0 0
    %313 = vmatprep.subr.bf16.mxu0 0
    %314 = vmatpush2.bf16.msra.mxu0 0
    %315 = vmatprep.subr.bf16.mxu0 0
    %316 = vmatpush2.bf16.msra.mxu0 0
    %317 = vmatprep.subr.bf16.mxu0 0
    %318 = vmatpush2.bf16.msra.mxu0 0
    %319 = vmatprep.mubr.bf16.mxu0 0
    %320 = vmatmul.mubr.bf16.gmra.mxu0 %v53
    %v321 = vpop.f32.mrf.mxu0
    %v322 = vadd.f32 0.0, %v321
    %v323 = vpop.f32.mrf.mxu0
    %v324 = vadd.f32 0.0, %v323
    %v325 = vpop.f32.mrf.mxu0
    %v326 = vpop.f32.mrf.mxu0
    %327 = vdwg.mxu0
    %v328 = vld [vmem:[#allocation5 + $0x900] sm:$0xff]
    %v329 = vld [vmem:[#allocation5 + $0x908] sm:$0xff]
    %v330 = vld [vmem:[#allocation5 + $0x910] sm:$0xff]
    %v331 = vld [vmem:[#allocation5 + $0x918] sm:$0xff]
    %v332 = vld [vmem:[#allocation5 + $0x920] sm:$0xff]
    %v333 = vld [vmem:[#allocation5 + $0x928] sm:$0xff]
    %v334 = vld [vmem:[#allocation5 + $0x930] sm:$0xff]
    %v335 = vld [vmem:[#allocation5 + $0x938] sm:$0xff]
    %v336 = vld [vmem:[#allocation5 + $0x940] sm:$0xff]
    %v337 = vld [vmem:[#allocation5 + $0x948] sm:$0xff]
    %v338 = vld [vmem:[#allocation5 + $0x950] sm:$0xff]
    %v339 = vld [vmem:[#allocation5 + $0x958] sm:$0xff]
    %v340 = vld [vmem:[#allocation5 + $0x960] sm:$0xff]
    %v341 = vld [vmem:[#allocation5 + $0x968] sm:$0xff]
    %v342 = vld [vmem:[#allocation5 + $0x970] sm:$0xff]
    %v343 = vld [vmem:[#allocation5 + $0x978] sm:$0xff]
    %v344 = vld [vmem:[#allocation5 + $0x980] sm:$0xff]
    %v345 = vld [vmem:[#allocation5 + $0x988] sm:$0xff]
    %v346 = vld [vmem:[#allocation5 + $0x990] sm:$0xff]
    %v347 = vld [vmem:[#allocation5 + $0x998] sm:$0xff]
    %v348 = vld [vmem:[#allocation5 + $0x9a0] sm:$0xff]
    %v349 = vld [vmem:[#allocation5 + $0x9a8] sm:$0xff]
    %v350 = vld [vmem:[#allocation5 + $0x9b0] sm:$0xff]
    %v351 = vld [vmem:[#allocation5 + $0x9b8] sm:$0xff]
    %v352 = vld [vmem:[#allocation5 + $0x9c0] sm:$0xff]
    %v353 = vld [vmem:[#allocation5 + $0x9c8] sm:$0xff]
    %v354 = vld [vmem:[#allocation5 + $0x9d0] sm:$0xff]
    %v355 = vld [vmem:[#allocation5 + $0x9d8] sm:$0xff]
    %v356 = vld [vmem:[#allocation5 + $0x9e0] sm:$0xff]
    %v357 = vld [vmem:[#allocation5 + $0x9e8] sm:$0xff]
    %v358 = vld [vmem:[#allocation5 + $0x9f0] sm:$0xff]
    %v359 = vld [vmem:[#allocation5 + $0x9f8] sm:$0xff]
    %v392 = vunpack.c.l.b16 %v328
    %v393 = vunpack.c.h.b16 %v328
    %v394 = vunpack.c.l.b16 %v329
    %v395 = vunpack.c.h.b16 %v329
    %v396 = vunpack.c.l.b16 %v330
    %v397 = vunpack.c.h.b16 %v330
    %v398 = vunpack.c.l.b16 %v331
    %v399 = vunpack.c.h.b16 %v331
    %v400 = vunpack.c.l.b16 %v332
    %v401 = vunpack.c.h.b16 %v332
    %v402 = vunpack.c.l.b16 %v333
    %v403 = vunpack.c.h.b16 %v333
    %v404 = vunpack.c.l.b16 %v334
    %v405 = vunpack.c.h.b16 %v334
    %v406 = vunpack.c.l.b16 %v335
    %v407 = vunpack.c.h.b16 %v335
    %v408 = vunpack.c.l.b16 %v336
    %v409 = vunpack.c.h.b16 %v336
    %v410 = vunpack.c.l.b16 %v337
    %v411 = vunpack.c.h.b16 %v337
    %v412 = vunpack.c.l.b16 %v338
    %v413 = vunpack.c.h.b16 %v338
    %v414 = vunpack.c.l.b16 %v339
    %v415 = vunpack.c.h.b16 %v339
    %v416 = vunpack.c.l.b16 %v340
    %v417 = vunpack.c.h.b16 %v340
    %v418 = vunpack.c.l.b16 %v341
    %v419 = vunpack.c.h.b16 %v341
    %v420 = vunpack.c.l.b16 %v342
    %v421 = vunpack.c.h.b16 %v342
    %v422 = vunpack.c.l.b16 %v343
    %v423 = vunpack.c.h.b16 %v343
    %v424 = vunpack.c.l.b16 %v344
    %v425 = vunpack.c.h.b16 %v344
    %v426 = vunpack.c.l.b16 %v345
    %v427 = vunpack.c.h.b16 %v345
    %v428 = vunpack.c.l.b16 %v346
    %v429 = vunpack.c.h.b16 %v346
    %v430 = vunpack.c.l.b16 %v347
    %v431 = vunpack.c.h.b16 %v347
    %v432 = vunpack.c.l.b16 %v348
    %v433 = vunpack.c.h.b16 %v348
    %v434 = vunpack.c.l.b16 %v349
    %v435 = vunpack.c.h.b16 %v349
    %v436 = vunpack.c.l.b16 %v350
    %v437 = vunpack.c.h.b16 %v350
    %v438 = vunpack.c.l.b16 %v351
    %v439 = vunpack.c.h.b16 %v351
    %v440 = vunpack.c.l.b16 %v352
    %v441 = vunpack.c.h.b16 %v352
    %v442 = vunpack.c.l.b16 %v353
    %v443 = vunpack.c.h.b16 %v353
    %v444 = vunpack.c.l.b16 %v354
    %v445 = vunpack.c.h.b16 %v354
    %v446 = vunpack.c.l.b16 %v355
    %v447 = vunpack.c.h.b16 %v355
    %v448 = vunpack.c.l.b16 %v356
    %v449 = vunpack.c.h.b16 %v356
    %v450 = vunpack.c.l.b16 %v357
    %v451 = vunpack.c.h.b16 %v357
    %v452 = vunpack.c.l.b16 %v358
    %v453 = vunpack.c.h.b16 %v358
    %v454 = vunpack.c.l.b16 %v359
    %v455 = vunpack.c.h.b16 %v359
    %v456 = vpack.c.b16 %v396, %v392
    %v457 = vpack.c.b16 %v397, %v393
    %v458 = vpack.c.b16 %v398, %v394
    %v459 = vpack.c.b16 %v399, %v395
    %v460 = vpack.c.b16 %v404, %v400
    %v461 = vpack.c.b16 %v405, %v401
    %v462 = vpack.c.b16 %v406, %v402
    %v463 = vpack.c.b16 %v407, %v403
    %v464 = vpack.c.b16 %v412, %v408
    %v465 = vpack.c.b16 %v413, %v409
    %v466 = vpack.c.b16 %v414, %v410
    %v467 = vpack.c.b16 %v415, %v411
    %v468 = vpack.c.b16 %v420, %v416
    %v469 = vpack.c.b16 %v421, %v417
    %v470 = vpack.c.b16 %v422, %v418
    %v471 = vpack.c.b16 %v423, %v419
    %v472 = vpack.c.b16 %v428, %v424
    %v473 = vpack.c.b16 %v429, %v425
    %v474 = vpack.c.b16 %v430, %v426
    %v475 = vpack.c.b16 %v431, %v427
    %v476 = vpack.c.b16 %v436, %v432
    %v477 = vpack.c.b16 %v437, %v433
    %v478 = vpack.c.b16 %v438, %v434
    %v479 = vpack.c.b16 %v439, %v435
    %v480 = vpack.c.b16 %v444, %v440
    %v481 = vpack.c.b16 %v445, %v441
    %v482 = vpack.c.b16 %v446, %v442
    %v483 = vpack.c.b16 %v447, %v443
    %v484 = vpack.c.b16 %v452, %v448
    %v485 = vpack.c.b16 %v453, %v449
    %v486 = vpack.c.b16 %v454, %v450
    %v487 = vpack.c.b16 %v455, %v451
    %520 = vmatprep.subr.bf16.mxu0 %v485
    %521 = vmatpush1.bf16.msra.mxu0 %v484
    %522 = vmatprep.subr.bf16.mxu0 %v481
    %523 = vmatpush1.bf16.msra.mxu0 %v480
    %524 = vmatprep.subr.bf16.mxu0 %v477
    %525 = vmatpush1.bf16.msra.mxu0 %v476
    %526 = vmatprep.subr.bf16.mxu0 %v473
    %527 = vmatpush1.bf16.msra.mxu0 %v472
    %528 = vmatprep.subr.bf16.mxu0 %v469
    %529 = vmatpush1.bf16.msra.mxu0 %v468
    %530 = vmatprep.subr.bf16.mxu0 %v465
    %531 = vmatpush1.bf16.msra.mxu0 %v464
    %532 = vmatprep.subr.bf16.mxu0 %v461
    %533 = vmatpush1.bf16.msra.mxu0 %v460
    %534 = vmatprep.subr.bf16.mxu0 %v457
    %535 = vmatpush1.bf16.msra.mxu0 %v456
    %536 = vmatprep.subr.bf16.mxu0 0
    %537 = vmatpush2.bf16.msra.mxu0 0
    %538 = vmatprep.subr.bf16.mxu0 0
    %539 = vmatpush2.bf16.msra.mxu0 0
    %540 = vmatprep.subr.bf16.mxu0 0
    %541 = vmatpush2.bf16.msra.mxu0 0
    %542 = vmatprep.subr.bf16.mxu0 0
    %543 = vmatpush2.bf16.msra.mxu0 0
    %544 = vmatprep.subr.bf16.mxu0 0
    %545 = vmatpush2.bf16.msra.mxu0 0
    %546 = vmatprep.subr.bf16.mxu0 0
    %547 = vmatpush2.bf16.msra.mxu0 0
    %548 = vmatprep.subr.bf16.mxu0 0
    %549 = vmatpush2.bf16.msra.mxu0 0
    %550 = vmatprep.subr.bf16.mxu0 0
    %551 = vmatpush2.bf16.msra.mxu0 0
    %552 = vmatprep.mubr.bf16.mxu0 0
    %553 = vmatmul.mubr.bf16.gmra.mxu0 %v53
    %v554 = vpop.f32.mrf.mxu0
    %v555 = vadd.f32 0.0, %v554
    %v556 = vpop.f32.mrf.mxu0
    %v557 = vadd.f32 0.0, %v556
    %v558 = vpop.f32.mrf.mxu0
    %v559 = vpop.f32.mrf.mxu0
    %560 = vdwg.mxu0
    %561 = vmatprep.subr.bf16.mxu0 %v487
    %562 = vmatpush1.bf16.msra.mxu0 %v486
    %563 = vmatprep.subr.bf16.mxu0 %v483
    %564 = vmatpush1.bf16.msra.mxu0 %v482
    %565 = vmatprep.subr.bf16.mxu0 %v479
    %566 = vmatpush1.bf16.msra.mxu0 %v478
    %567 = vmatprep.subr.bf16.mxu0 %v475
    %568 = vmatpush1.bf16.msra.mxu0 %v474
    %569 = vmatprep.subr.bf16.mxu0 %v471
    %570 = vmatpush1.bf16.msra.mxu0 %v470
    %571 = vmatprep.subr.bf16.mxu0 %v467
    %572 = vmatpush1.bf16.msra.mxu0 %v466
    %573 = vmatprep.subr.bf16.mxu0 %v463
    %574 = vmatpush1.bf16.msra.mxu0 %v462
    %575 = vmatprep.subr.bf16.mxu0 %v459
    %576 = vmatpush1.bf16.msra.mxu0 %v458
    %577 = vmatprep.subr.bf16.mxu0 0
    %578 = vmatpush2.bf16.msra.mxu0 0
    %579 = vmatprep.subr.bf16.mxu0 0
    %580 = vmatpush2.bf16.msra.mxu0 0
    %581 = vmatprep.subr.bf16.mxu0 0
    %582 = vmatpush2.bf16.msra.mxu0 0
    %583 = vmatprep.subr.bf16.mxu0 0
    %584 = vmatpush2.bf16.msra.mxu0 0
    %585 = vmatprep.subr.bf16.mxu0 0
    %586 = vmatpush2.bf16.msra.mxu0 0
    %587 = vmatprep.subr.bf16.mxu0 0
    %588 = vmatpush2.bf16.msra.mxu0 0
    %589 = vmatprep.subr.bf16.mxu0 0
    %590 = vmatpush2.bf16.msra.mxu0 0
    %591 = vmatprep.subr.bf16.mxu0 0
    %592 = vmatpush2.bf16.msra.mxu0 0
    %593 = vmatprep.mubr.bf16.mxu0 0
    %594 = vmatmul.mubr.bf16.gmra.mxu0 %v53
    %v595 = vpop.f32.mrf.mxu0
    %v596 = vadd.f32 0.0, %v595
    %v597 = vpop.f32.mrf.mxu0
    %v598 = vadd.f32 0.0, %v597
    %v599 = vpop.f32.mrf.mxu0
    %v600 = vpop.f32.mrf.mxu0
    %601 = vdwg.mxu0
    %v602 = vld [vmem:[#allocation7] sm:$0xff]
    %v604 = vlaneseq
    %v605 = vshrl.u32 %v604, 7
    %v606 = vsub.s32 0, %v605
    %v607 = vrot.slane %v602, %v606
    %v608 = vlaneseq
    %v609 = vshrl.u32 %v608, 7
    %v610 = vsub.s32 1, %v609
    %v611 = vrot.slane %v602, %v610
    %v612 = vlaneseq
    %v613 = vshrl.u32 %v612, 7
    %v614 = vsub.s32 2, %v613
    %v615 = vrot.slane %v602, %v614
    %v616 = vlaneseq
    %v617 = vshrl.u32 %v616, 7
    %v618 = vsub.s32 3, %v617
    %v619 = vrot.slane %v602, %v618
    %v620 = vlaneseq
    %v621 = vshrl.u32 %v620, 7
    %v622 = vsub.s32 4, %v621
    %v623 = vrot.slane %v602, %v622
    %v624 = vlaneseq
    %v625 = vshrl.u32 %v624, 7
    %v626 = vsub.s32 5, %v625
    %v627 = vrot.slane %v602, %v626
    %v628 = vlaneseq
    %v629 = vshrl.u32 %v628, 7
    %v630 = vsub.s32 6, %v629
    %v631 = vrot.slane %v602, %v630
    %v632 = vlaneseq
    %v633 = vshrl.u32 %v632, 7
    %v634 = vsub.s32 7, %v633
    %v635 = vrot.slane %v602, %v634
    %v644 = vadd.f32 %v281, %v607
    %v645 = vadd.f32 %v283, %v611
    %v646 = vadd.f32 %v322, %v615
    %v647 = vadd.f32 %v324, %v619
    %v648 = vadd.f32 %v555, %v623
    %v649 = vadd.f32 %v557, %v627
    %v650 = vadd.f32 %v596, %v631
    %v651 = vadd.f32 %v598, %v635
    %v652 = vmax.f32 %v644, 0.0
    %v653 = vmax.f32 %v645, 0.0
    %v654 = vmax.f32 %v646, 0.0
    %v655 = vmax.f32 %v647, 0.0
    %v656 = vmax.f32 %v648, 0.0
    %v657 = vmax.f32 %v649, 0.0
    %v658 = vmax.f32 %v650, 0.0
    %v659 = vmax.f32 %v651, 0.0
    %v660 = vpack.c.bf16 %v652, %v652
    %v661 = vpack.c.bf16 %v653, %v653
    %v662 = vpack.c.bf16 %v654, %v654
    %v663 = vpack.c.bf16 %v655, %v655
    %v664 = vpack.c.bf16 %v656, %v656
    %v665 = vpack.c.bf16 %v657, %v657
    %v666 = vpack.c.bf16 %v658, %v658
    %v667 = vpack.c.bf16 %v659, %v659
    %v668 = vld [vmem:[#allocation5] sm:$0xff]
    %v669 = vld [vmem:[#allocation5 + $0x8] sm:$0xff]
    %v670 = vld [vmem:[#allocation5 + $0x10] sm:$0xff]
    %v671 = vld [vmem:[#allocation5 + $0x18] sm:$0xff]
    %v672 = vld [vmem:[#allocation5 + $0x20] sm:$0xff]
    %v673 = vld [vmem:[#allocation5 + $0x28] sm:$0xff]
    %v674 = vld [vmem:[#allocation5 + $0x30] sm:$0xff]
    %v675 = vld [vmem:[#allocation5 + $0x38] sm:$0xff]
    %v676 = vld [vmem:[#allocation5 + $0x40] sm:$0xff]
    %v677 = vld [vmem:[#allocation5 + $0x48] sm:$0xff]
    %v678 = vld [vmem:[#allocation5 + $0x50] sm:$0xff]
    %v679 = vld [vmem:[#allocation5 + $0x58] sm:$0xff]
    %v680 = vld [vmem:[#allocation5 + $0x60] sm:$0xff]
    %v681 = vld [vmem:[#allocation5 + $0x68] sm:$0xff]
    %v682 = vld [vmem:[#allocation5 + $0x70] sm:$0xff]
    %v683 = vld [vmem:[#allocation5 + $0x78] sm:$0xff]
    %v684 = vld [vmem:[#allocation5 + $0x80] sm:$0xff]
    %v685 = vld [vmem:[#allocation5 + $0x88] sm:$0xff]
    %v686 = vld [vmem:[#allocation5 + $0x90] sm:$0xff]
    %v687 = vld [vmem:[#allocation5 + $0x98] sm:$0xff]
    %v688 = vld [vmem:[#allocation5 + $0xa0] sm:$0xff]
    %v689 = vld [vmem:[#allocation5 + $0xa8] sm:$0xff]
    %v690 = vld [vmem:[#allocation5 + $0xb0] sm:$0xff]
    %v691 = vld [vmem:[#allocation5 + $0xb8] sm:$0xff]
    %v692 = vld [vmem:[#allocation5 + $0xc0] sm:$0xff]
    %v693 = vld [vmem:[#allocation5 + $0xc8] sm:$0xff]
    %v694 = vld [vmem:[#allocation5 + $0xd0] sm:$0xff]
    %v695 = vld [vmem:[#allocation5 + $0xd8] sm:$0xff]
    %v696 = vld [vmem:[#allocation5 + $0xe0] sm:$0xff]
    %v697 = vld [vmem:[#allocation5 + $0xe8] sm:$0xff]
    %v698 = vld [vmem:[#allocation5 + $0xf0] sm:$0xff]
    %v699 = vld [vmem:[#allocation5 + $0xf8] sm:$0xff]
    %v700 = vld [vmem:[#allocation5 + $0x100] sm:$0xff]
    %v701 = vld [vmem:[#allocation5 + $0x108] sm:$0xff]
    %v702 = vld [vmem:[#allocation5 + $0x110] sm:$0xff]
    %v703 = vld [vmem:[#allocation5 + $0x118] sm:$0xff]
    %v704 = vld [vmem:[#allocation5 + $0x120] sm:$0xff]
    %v705 = vld [vmem:[#allocation5 + $0x128] sm:$0xff]
    %v706 = vld [vmem:[#allocation5 + $0x130] sm:$0xff]
    %v707 = vld [vmem:[#allocation5 + $0x138] sm:$0xff]
    %v708 = vld [vmem:[#allocation5 + $0x140] sm:$0xff]
    %v709 = vld [vmem:[#allocation5 + $0x148] sm:$0xff]
    %v710 = vld [vmem:[#allocation5 + $0x150] sm:$0xff]
    %v711 = vld [vmem:[#allocation5 + $0x158] sm:$0xff]
    %v712 = vld [vmem:[#allocation5 + $0x160] sm:$0xff]
    %v713 = vld [vmem:[#allocation5 + $0x168] sm:$0xff]
    %v714 = vld [vmem:[#allocation5 + $0x170] sm:$0xff]
    %v715 = vld [vmem:[#allocation5 + $0x178] sm:$0xff]
    %v716 = vld [vmem:[#allocation5 + $0x180] sm:$0xff]
    %v717 = vld [vmem:[#allocation5 + $0x188] sm:$0xff]
    %v718 = vld [vmem:[#allocation5 + $0x190] sm:$0xff]
    %v719 = vld [vmem:[#allocation5 + $0x198] sm:$0xff]
    %v720 = vld [vmem:[#allocation5 + $0x1a0] sm:$0xff]
    %v721 = vld [vmem:[#allocation5 + $0x1a8] sm:$0xff]
    %v722 = vld [vmem:[#allocation5 + $0x1b0] sm:$0xff]
    %v723 = vld [vmem:[#allocation5 + $0x1b8] sm:$0xff]
    %v724 = vld [vmem:[#allocation5 + $0x1c0] sm:$0xff]
    %v725 = vld [vmem:[#allocation5 + $0x1c8] sm:$0xff]
    %v726 = vld [vmem:[#allocation5 + $0x1d0] sm:$0xff]
    %v727 = vld [vmem:[#allocation5 + $0x1d8] sm:$0xff]
    %v728 = vld [vmem:[#allocation5 + $0x1e0] sm:$0xff]
    %v729 = vld [vmem:[#allocation5 + $0x1e8] sm:$0xff]
    %v730 = vld [vmem:[#allocation5 + $0x1f0] sm:$0xff]
    %v731 = vld [vmem:[#allocation5 + $0x1f8] sm:$0xff]
    %v732 = vld [vmem:[#allocation5 + $0x200] sm:$0xff]
    %v733 = vld [vmem:[#allocation5 + $0x208] sm:$0xff]
    %v734 = vld [vmem:[#allocation5 + $0x210] sm:$0xff]
    %v735 = vld [vmem:[#allocation5 + $0x218] sm:$0xff]
    %v736 = vld [vmem:[#allocation5 + $0x220] sm:$0xff]
    %v737 = vld [vmem:[#allocation5 + $0x228] sm:$0xff]
    %v738 = vld [vmem:[#allocation5 + $0x230] sm:$0xff]
    %v739 = vld [vmem:[#allocation5 + $0x238] sm:$0xff]
    %v740 = vld [vmem:[#allocation5 + $0x240] sm:$0xff]
    %v741 = vld [vmem:[#allocation5 + $0x248] sm:$0xff]
    %v742 = vld [vmem:[#allocation5 + $0x250] sm:$0xff]
    %v743 = vld [vmem:[#allocation5 + $0x258] sm:$0xff]
    %v744 = vld [vmem:[#allocation5 + $0x260] sm:$0xff]
    %v745 = vld [vmem:[#allocation5 + $0x268] sm:$0xff]
    %v746 = vld [vmem:[#allocation5 + $0x270] sm:$0xff]
    %v747 = vld [vmem:[#allocation5 + $0x278] sm:$0xff]
    %v748 = vld [vmem:[#allocation5 + $0x280] sm:$0xff]
    %v749 = vld [vmem:[#allocation5 + $0x288] sm:$0xff]
    %v750 = vld [vmem:[#allocation5 + $0x290] sm:$0xff]
    %v751 = vld [vmem:[#allocation5 + $0x298] sm:$0xff]
    %v752 = vld [vmem:[#allocation5 + $0x2a0] sm:$0xff]
    %v753 = vld [vmem:[#allocation5 + $0x2a8] sm:$0xff]
    %v754 = vld [vmem:[#allocation5 + $0x2b0] sm:$0xff]
    %v755 = vld [vmem:[#allocation5 + $0x2b8] sm:$0xff]
    %v756 = vld [vmem:[#allocation5 + $0x2c0] sm:$0xff]
    %v757 = vld [vmem:[#allocation5 + $0x2c8] sm:$0xff]
    %v758 = vld [vmem:[#allocation5 + $0x2d0] sm:$0xff]
    %v759 = vld [vmem:[#allocation5 + $0x2d8] sm:$0xff]
    %v760 = vld [vmem:[#allocation5 + $0x2e0] sm:$0xff]
    %v761 = vld [vmem:[#allocation5 + $0x2e8] sm:$0xff]
    %v762 = vld [vmem:[#allocation5 + $0x2f0] sm:$0xff]
    %v763 = vld [vmem:[#allocation5 + $0x2f8] sm:$0xff]
    %v764 = vld [vmem:[#allocation5 + $0x300] sm:$0xff]
    %v765 = vld [vmem:[#allocation5 + $0x308] sm:$0xff]
    %v766 = vld [vmem:[#allocation5 + $0x310] sm:$0xff]
    %v767 = vld [vmem:[#allocation5 + $0x318] sm:$0xff]
    %v768 = vld [vmem:[#allocation5 + $0x320] sm:$0xff]
    %v769 = vld [vmem:[#allocation5 + $0x328] sm:$0xff]
    %v770 = vld [vmem:[#allocation5 + $0x330] sm:$0xff]
    %v771 = vld [vmem:[#allocation5 + $0x338] sm:$0xff]
    %v772 = vld [vmem:[#allocation5 + $0x340] sm:$0xff]
    %v773 = vld [vmem:[#allocation5 + $0x348] sm:$0xff]
    %v774 = vld [vmem:[#allocation5 + $0x350] sm:$0xff]
    %v775 = vld [vmem:[#allocation5 + $0x358] sm:$0xff]
    %v776 = vld [vmem:[#allocation5 + $0x360] sm:$0xff]
    %v777 = vld [vmem:[#allocation5 + $0x368] sm:$0xff]
    %v778 = vld [vmem:[#allocation5 + $0x370] sm:$0xff]
    %v779 = vld [vmem:[#allocation5 + $0x378] sm:$0xff]
    %v780 = vld [vmem:[#allocation5 + $0x380] sm:$0xff]
    %v781 = vld [vmem:[#allocation5 + $0x388] sm:$0xff]
    %v782 = vld [vmem:[#allocation5 + $0x390] sm:$0xff]
    %v783 = vld [vmem:[#allocation5 + $0x398] sm:$0xff]
    %v784 = vld [vmem:[#allocation5 + $0x3a0] sm:$0xff]
    %v785 = vld [vmem:[#allocation5 + $0x3a8] sm:$0xff]
    %v786 = vld [vmem:[#allocation5 + $0x3b0] sm:$0xff]
    %v787 = vld [vmem:[#allocation5 + $0x3b8] sm:$0xff]
    %v788 = vld [vmem:[#allocation5 + $0x3c0] sm:$0xff]
    %v789 = vld [vmem:[#allocation5 + $0x3c8] sm:$0xff]
    %v790 = vld [vmem:[#allocation5 + $0x3d0] sm:$0xff]
    %v791 = vld [vmem:[#allocation5 + $0x3d8] sm:$0xff]
    %v792 = vld [vmem:[#allocation5 + $0x3e0] sm:$0xff]
    %v793 = vld [vmem:[#allocation5 + $0x3e8] sm:$0xff]
    %v794 = vld [vmem:[#allocation5 + $0x3f0] sm:$0xff]
    %v795 = vld [vmem:[#allocation5 + $0x3f8] sm:$0xff]
    %v796 = vld [vmem:[#allocation5 + $0x400] sm:$0xff]
    %v797 = vld [vmem:[#allocation5 + $0x408] sm:$0xff]
    %v798 = vld [vmem:[#allocation5 + $0x410] sm:$0xff]
    %v799 = vld [vmem:[#allocation5 + $0x418] sm:$0xff]
    %v800 = vld [vmem:[#allocation5 + $0x420] sm:$0xff]
    %v801 = vld [vmem:[#allocation5 + $0x428] sm:$0xff]
    %v802 = vld [vmem:[#allocation5 + $0x430] sm:$0xff]
    %v803 = vld [vmem:[#allocation5 + $0x438] sm:$0xff]
    %v804 = vld [vmem:[#allocation5 + $0x440] sm:$0xff]
    %v805 = vld [vmem:[#allocation5 + $0x448] sm:$0xff]
    %v806 = vld [vmem:[#allocation5 + $0x450] sm:$0xff]
    %v807 = vld [vmem:[#allocation5 + $0x458] sm:$0xff]
    %v808 = vld [vmem:[#allocation5 + $0x460] sm:$0xff]
    %v809 = vld [vmem:[#allocation5 + $0x468] sm:$0xff]
    %v810 = vld [vmem:[#allocation5 + $0x470] sm:$0xff]
    %v811 = vld [vmem:[#allocation5 + $0x478] sm:$0xff]
    %v812 = vld [vmem:[#allocation5 + $0x480] sm:$0xff]
    %v813 = vld [vmem:[#allocation5 + $0x488] sm:$0xff]
    %v814 = vld [vmem:[#allocation5 + $0x490] sm:$0xff]
    %v815 = vld [vmem:[#allocation5 + $0x498] sm:$0xff]
    %v816 = vld [vmem:[#allocation5 + $0x4a0] sm:$0xff]
    %v817 = vld [vmem:[#allocation5 + $0x4a8] sm:$0xff]
    %v818 = vld [vmem:[#allocation5 + $0x4b0] sm:$0xff]
    %v819 = vld [vmem:[#allocation5 + $0x4b8] sm:$0xff]
    %v820 = vld [vmem:[#allocation5 + $0x4c0] sm:$0xff]
    %v821 = vld [vmem:[#allocation5 + $0x4c8] sm:$0xff]
    %v822 = vld [vmem:[#allocation5 + $0x4d0] sm:$0xff]
    %v823 = vld [vmem:[#allocation5 + $0x4d8] sm:$0xff]
    %v824 = vld [vmem:[#allocation5 + $0x4e0] sm:$0xff]
    %v825 = vld [vmem:[#allocation5 + $0x4e8] sm:$0xff]
    %v826 = vld [vmem:[#allocation5 + $0x4f0] sm:$0xff]
    %v827 = vld [vmem:[#allocation5 + $0x4f8] sm:$0xff]
    %v828 = vld [vmem:[#allocation5 + $0x500] sm:$0xff]
    %v829 = vld [vmem:[#allocation5 + $0x508] sm:$0xff]
    %v830 = vld [vmem:[#allocation5 + $0x510] sm:$0xff]
    %v831 = vld [vmem:[#allocation5 + $0x518] sm:$0xff]
    %v832 = vld [vmem:[#allocation5 + $0x520] sm:$0xff]
    %v833 = vld [vmem:[#allocation5 + $0x528] sm:$0xff]
    %v834 = vld [vmem:[#allocation5 + $0x530] sm:$0xff]
    %v835 = vld [vmem:[#allocation5 + $0x538] sm:$0xff]
    %v836 = vld [vmem:[#allocation5 + $0x540] sm:$0xff]
    %v837 = vld [vmem:[#allocation5 + $0x548] sm:$0xff]
    %v838 = vld [vmem:[#allocation5 + $0x550] sm:$0xff]
    %v839 = vld [vmem:[#allocation5 + $0x558] sm:$0xff]
    %v840 = vld [vmem:[#allocation5 + $0x560] sm:$0xff]
    %v841 = vld [vmem:[#allocation5 + $0x568] sm:$0xff]
    %v842 = vld [vmem:[#allocation5 + $0x570] sm:$0xff]
    %v843 = vld [vmem:[#allocation5 + $0x578] sm:$0xff]
    %v844 = vld [vmem:[#allocation5 + $0x580] sm:$0xff]
    %v845 = vld [vmem:[#allocation5 + $0x588] sm:$0xff]
    %v846 = vld [vmem:[#allocation5 + $0x590] sm:$0xff]
    %v847 = vld [vmem:[#allocation5 + $0x598] sm:$0xff]
    %v848 = vld [vmem:[#allocation5 + $0x5a0] sm:$0xff]
    %v849 = vld [vmem:[#allocation5 + $0x5a8] sm:$0xff]
    %v850 = vld [vmem:[#allocation5 + $0x5b0] sm:$0xff]
    %v851 = vld [vmem:[#allocation5 + $0x5b8] sm:$0xff]
    %v852 = vld [vmem:[#allocation5 + $0x5c0] sm:$0xff]
    %v853 = vld [vmem:[#allocation5 + $0x5c8] sm:$0xff]
    %v854 = vld [vmem:[#allocation5 + $0x5d0] sm:$0xff]
    %v855 = vld [vmem:[#allocation5 + $0x5d8] sm:$0xff]
    %v856 = vld [vmem:[#allocation5 + $0x5e0] sm:$0xff]
    %v857 = vld [vmem:[#allocation5 + $0x5e8] sm:$0xff]
    %v858 = vld [vmem:[#allocation5 + $0x5f0] sm:$0xff]
    %v859 = vld [vmem:[#allocation5 + $0x5f8] sm:$0xff]
    %v860 = vld [vmem:[#allocation5 + $0x600] sm:$0xff]
    %v861 = vld [vmem:[#allocation5 + $0x608] sm:$0xff]
    %v862 = vld [vmem:[#allocation5 + $0x610] sm:$0xff]
    %v863 = vld [vmem:[#allocation5 + $0x618] sm:$0xff]
    %v864 = vld [vmem:[#allocation5 + $0x620] sm:$0xff]
    %v865 = vld [vmem:[#allocation5 + $0x628] sm:$0xff]
    %v866 = vld [vmem:[#allocation5 + $0x630] sm:$0xff]
    %v867 = vld [vmem:[#allocation5 + $0x638] sm:$0xff]
    %v868 = vld [vmem:[#allocation5 + $0x640] sm:$0xff]
    %v869 = vld [vmem:[#allocation5 + $0x648] sm:$0xff]
    %v870 = vld [vmem:[#allocation5 + $0x650] sm:$0xff]
    %v871 = vld [vmem:[#allocation5 + $0x658] sm:$0xff]
    %v872 = vld [vmem:[#allocation5 + $0x660] sm:$0xff]
    %v873 = vld [vmem:[#allocation5 + $0x668] sm:$0xff]
    %v874 = vld [vmem:[#allocation5 + $0x670] sm:$0xff]
    %v875 = vld [vmem:[#allocation5 + $0x678] sm:$0xff]
    %v876 = vld [vmem:[#allocation5 + $0x680] sm:$0xff]
    %v877 = vld [vmem:[#allocation5 + $0x688] sm:$0xff]
    %v878 = vld [vmem:[#allocation5 + $0x690] sm:$0xff]
    %v879 = vld [vmem:[#allocation5 + $0x698] sm:$0xff]
    %v880 = vld [vmem:[#allocation5 + $0x6a0] sm:$0xff]
    %v881 = vld [vmem:[#allocation5 + $0x6a8] sm:$0xff]
    %v882 = vld [vmem:[#allocation5 + $0x6b0] sm:$0xff]
    %v883 = vld [vmem:[#allocation5 + $0x6b8] sm:$0xff]
    %v884 = vld [vmem:[#allocation5 + $0x6c0] sm:$0xff]
    %v885 = vld [vmem:[#allocation5 + $0x6c8] sm:$0xff]
    %v886 = vld [vmem:[#allocation5 + $0x6d0] sm:$0xff]
    %v887 = vld [vmem:[#allocation5 + $0x6d8] sm:$0xff]
    %v888 = vld [vmem:[#allocation5 + $0x6e0] sm:$0xff]
    %v889 = vld [vmem:[#allocation5 + $0x6e8] sm:$0xff]
    %v890 = vld [vmem:[#allocation5 + $0x6f0] sm:$0xff]
    %v891 = vld [vmem:[#allocation5 + $0x6f8] sm:$0xff]
    %v892 = vld [vmem:[#allocation5 + $0x700] sm:$0xff]
    %v893 = vld [vmem:[#allocation5 + $0x708] sm:$0xff]
    %v894 = vld [vmem:[#allocation5 + $0x710] sm:$0xff]
    %v895 = vld [vmem:[#allocation5 + $0x718] sm:$0xff]
    %v896 = vld [vmem:[#allocation5 + $0x720] sm:$0xff]
    %v897 = vld [vmem:[#allocation5 + $0x728] sm:$0xff]
    %v898 = vld [vmem:[#allocation5 + $0x730] sm:$0xff]
    %v899 = vld [vmem:[#allocation5 + $0x738] sm:$0xff]
    %v900 = vld [vmem:[#allocation5 + $0x740] sm:$0xff]
    %v901 = vld [vmem:[#allocation5 + $0x748] sm:$0xff]
    %v902 = vld [vmem:[#allocation5 + $0x750] sm:$0xff]
    %v903 = vld [vmem:[#allocation5 + $0x758] sm:$0xff]
    %v904 = vld [vmem:[#allocation5 + $0x760] sm:$0xff]
    %v905 = vld [vmem:[#allocation5 + $0x768] sm:$0xff]
    %v906 = vld [vmem:[#allocation5 + $0x770] sm:$0xff]
    %v907 = vld [vmem:[#allocation5 + $0x778] sm:$0xff]
    %v908 = vld [vmem:[#allocation5 + $0x780] sm:$0xff]
    %v909 = vld [vmem:[#allocation5 + $0x788] sm:$0xff]
    %v910 = vld [vmem:[#allocation5 + $0x790] sm:$0xff]
    %v911 = vld [vmem:[#allocation5 + $0x798] sm:$0xff]
    %v912 = vld [vmem:[#allocation5 + $0x7a0] sm:$0xff]
    %v913 = vld [vmem:[#allocation5 + $0x7a8] sm:$0xff]
    %v914 = vld [vmem:[#allocation5 + $0x7b0] sm:$0xff]
    %v915 = vld [vmem:[#allocation5 + $0x7b8] sm:$0xff]
    %v916 = vld [vmem:[#allocation5 + $0x7c0] sm:$0xff]
    %v917 = vld [vmem:[#allocation5 + $0x7c8] sm:$0xff]
    %v918 = vld [vmem:[#allocation5 + $0x7d0] sm:$0xff]
    %v919 = vld [vmem:[#allocation5 + $0x7d8] sm:$0xff]
    %v920 = vld [vmem:[#allocation5 + $0x7e0] sm:$0xff]
    %v921 = vld [vmem:[#allocation5 + $0x7e8] sm:$0xff]
    %v922 = vld [vmem:[#allocation5 + $0x7f0] sm:$0xff]
    %v923 = vld [vmem:[#allocation5 + $0x7f8] sm:$0xff]
    %v924 = vld [vmem:[#allocation7 + $0x8] sm:$0xf]
    %v926 = vlaneseq
    %v927 = vshrl.u32 %v926, 7
    %v928 = vsub.s32 0, %v927
    %v929 = vrot.slane %v924, %v928
    %v930 = vlaneseq
    %v931 = vshrl.u32 %v930, 7
    %v932 = vsub.s32 1, %v931
    %v933 = vrot.slane %v924, %v932
    %v934 = vlaneseq
    %v935 = vshrl.u32 %v934, 7
    %v936 = vsub.s32 2, %v935
    %v937 = vrot.slane %v924, %v936
    %v938 = vlaneseq
    %v939 = vshrl.u32 %v938, 7
    %v940 = vsub.s32 3, %v939
    %v941 = vrot.slane %v924, %v940
    %v1202 = vunpack.c.l.b16 %v668
    %v1203 = vunpack.c.h.b16 %v668
    %v1204 = vunpack.c.l.b16 %v669
    %v1205 = vunpack.c.h.b16 %v669
    %v1206 = vunpack.c.l.b16 %v670
    %v1207 = vunpack.c.h.b16 %v670
    %v1208 = vunpack.c.l.b16 %v671
    %v1209 = vunpack.c.h.b16 %v671
    %v1210 = vunpack.c.l.b16 %v672
    %v1211 = vunpack.c.h.b16 %v672
    %v1212 = vunpack.c.l.b16 %v673
    %v1213 = vunpack.c.h.b16 %v673
    %v1214 = vunpack.c.l.b16 %v674
    %v1215 = vunpack.c.h.b16 %v674
    %v1216 = vunpack.c.l.b16 %v675
    %v1217 = vunpack.c.h.b16 %v675
    %v1218 = vunpack.c.l.b16 %v676
    %v1219 = vunpack.c.h.b16 %v676
    %v1220 = vunpack.c.l.b16 %v677
    %v1221 = vunpack.c.h.b16 %v677
    %v1222 = vunpack.c.l.b16 %v678
    %v1223 = vunpack.c.h.b16 %v678
    %v1224 = vunpack.c.l.b16 %v679
    %v1225 = vunpack.c.h.b16 %v679
    %v1226 = vunpack.c.l.b16 %v680
    %v1227 = vunpack.c.h.b16 %v680
    %v1228 = vunpack.c.l.b16 %v681
    %v1229 = vunpack.c.h.b16 %v681
    %v1230 = vunpack.c.l.b16 %v682
    %v1231 = vunpack.c.h.b16 %v682
    %v1232 = vunpack.c.l.b16 %v683
    %v1233 = vunpack.c.h.b16 %v683
    %v1234 = vunpack.c.l.b16 %v684
    %v1235 = vunpack.c.h.b16 %v684
    %v1236 = vunpack.c.l.b16 %v685
    %v1237 = vunpack.c.h.b16 %v685
    %v1238 = vunpack.c.l.b16 %v686
    %v1239 = vunpack.c.h.b16 %v686
    %v1240 = vunpack.c.l.b16 %v687
    %v1241 = vunpack.c.h.b16 %v687
    %v1242 = vunpack.c.l.b16 %v688
    %v1243 = vunpack.c.h.b16 %v688
    %v1244 = vunpack.c.l.b16 %v689
    %v1245 = vunpack.c.h.b16 %v689
    %v1246 = vunpack.c.l.b16 %v690
    %v1247 = vunpack.c.h.b16 %v690
    %v1248 = vunpack.c.l.b16 %v691
    %v1249 = vunpack.c.h.b16 %v691
    %v1250 = vunpack.c.l.b16 %v692
    %v1251 = vunpack.c.h.b16 %v692
    %v1252 = vunpack.c.l.b16 %v693
    %v1253 = vunpack.c.h.b16 %v693
    %v1254 = vunpack.c.l.b16 %v694
    %v1255 = vunpack.c.h.b16 %v694
    %v1256 = vunpack.c.l.b16 %v695
    %v1257 = vunpack.c.h.b16 %v695
    %v1258 = vunpack.c.l.b16 %v696
    %v1259 = vunpack.c.h.b16 %v696
    %v1260 = vunpack.c.l.b16 %v697
    %v1261 = vunpack.c.h.b16 %v697
    %v1262 = vunpack.c.l.b16 %v698
    %v1263 = vunpack.c.h.b16 %v698
    %v1264 = vunpack.c.l.b16 %v699
    %v1265 = vunpack.c.h.b16 %v699
    %v1266 = vunpack.c.l.b16 %v700
    %v1267 = vunpack.c.h.b16 %v700
    %v1268 = vunpack.c.l.b16 %v701
    %v1269 = vunpack.c.h.b16 %v701
    %v1270 = vunpack.c.l.b16 %v702
    %v1271 = vunpack.c.h.b16 %v702
    %v1272 = vunpack.c.l.b16 %v703
    %v1273 = vunpack.c.h.b16 %v703
    %v1274 = vunpack.c.l.b16 %v704
    %v1275 = vunpack.c.h.b16 %v704
    %v1276 = vunpack.c.l.b16 %v705
    %v1277 = vunpack.c.h.b16 %v705
    %v1278 = vunpack.c.l.b16 %v706
    %v1279 = vunpack.c.h.b16 %v706
    %v1280 = vunpack.c.l.b16 %v707
    %v1281 = vunpack.c.h.b16 %v707
    %v1282 = vunpack.c.l.b16 %v708
    %v1283 = vunpack.c.h.b16 %v708
    %v1284 = vunpack.c.l.b16 %v709
    %v1285 = vunpack.c.h.b16 %v709
    %v1286 = vunpack.c.l.b16 %v710
    %v1287 = vunpack.c.h.b16 %v710
    %v1288 = vunpack.c.l.b16 %v711
    %v1289 = vunpack.c.h.b16 %v711
    %v1290 = vunpack.c.l.b16 %v712
    %v1291 = vunpack.c.h.b16 %v712
    %v1292 = vunpack.c.l.b16 %v713
    %v1293 = vunpack.c.h.b16 %v713
    %v1294 = vunpack.c.l.b16 %v714
    %v1295 = vunpack.c.h.b16 %v714
    %v1296 = vunpack.c.l.b16 %v715
    %v1297 = vunpack.c.h.b16 %v715
    %v1298 = vunpack.c.l.b16 %v716
    %v1299 = vunpack.c.h.b16 %v716
    %v1300 = vunpack.c.l.b16 %v717
    %v1301 = vunpack.c.h.b16 %v717
    %v1302 = vunpack.c.l.b16 %v718
    %v1303 = vunpack.c.h.b16 %v718
    %v1304 = vunpack.c.l.b16 %v719
    %v1305 = vunpack.c.h.b16 %v719
    %v1306 = vunpack.c.l.b16 %v720
    %v1307 = vunpack.c.h.b16 %v720
    %v1308 = vunpack.c.l.b16 %v721
    %v1309 = vunpack.c.h.b16 %v721
    %v1310 = vunpack.c.l.b16 %v722
    %v1311 = vunpack.c.h.b16 %v722
    %v1312 = vunpack.c.l.b16 %v723
    %v1313 = vunpack.c.h.b16 %v723
    %v1314 = vunpack.c.l.b16 %v724
    %v1315 = vunpack.c.h.b16 %v724
    %v1316 = vunpack.c.l.b16 %v725
    %v1317 = vunpack.c.h.b16 %v725
    %v1318 = vunpack.c.l.b16 %v726
    %v1319 = vunpack.c.h.b16 %v726
    %v1320 = vunpack.c.l.b16 %v727
    %v1321 = vunpack.c.h.b16 %v727
    %v1322 = vunpack.c.l.b16 %v728
    %v1323 = vunpack.c.h.b16 %v728
    %v1324 = vunpack.c.l.b16 %v729
    %v1325 = vunpack.c.h.b16 %v729
    %v1326 = vunpack.c.l.b16 %v730
    %v1327 = vunpack.c.h.b16 %v730
    %v1328 = vunpack.c.l.b16 %v731
    %v1329 = vunpack.c.h.b16 %v731
    %v1330 = vunpack.c.l.b16 %v732
    %v1331 = vunpack.c.h.b16 %v732
    %v1332 = vunpack.c.l.b16 %v733
    %v1333 = vunpack.c.h.b16 %v733
    %v1334 = vunpack.c.l.b16 %v734
    %v1335 = vunpack.c.h.b16 %v734
    %v1336 = vunpack.c.l.b16 %v735
    %v1337 = vunpack.c.h.b16 %v735
    %v1338 = vunpack.c.l.b16 %v736
    %v1339 = vunpack.c.h.b16 %v736
    %v1340 = vunpack.c.l.b16 %v737
    %v1341 = vunpack.c.h.b16 %v737
    %v1342 = vunpack.c.l.b16 %v738
    %v1343 = vunpack.c.h.b16 %v738
    %v1344 = vunpack.c.l.b16 %v739
    %v1345 = vunpack.c.h.b16 %v739
    %v1346 = vunpack.c.l.b16 %v740
    %v1347 = vunpack.c.h.b16 %v740
    %v1348 = vunpack.c.l.b16 %v741
    %v1349 = vunpack.c.h.b16 %v741
    %v1350 = vunpack.c.l.b16 %v742
    %v1351 = vunpack.c.h.b16 %v742
    %v1352 = vunpack.c.l.b16 %v743
    %v1353 = vunpack.c.h.b16 %v743
    %v1354 = vunpack.c.l.b16 %v744
    %v1355 = vunpack.c.h.b16 %v744
    %v1356 = vunpack.c.l.b16 %v745
    %v1357 = vunpack.c.h.b16 %v745
    %v1358 = vunpack.c.l.b16 %v746
    %v1359 = vunpack.c.h.b16 %v746
    %v1360 = vunpack.c.l.b16 %v747
    %v1361 = vunpack.c.h.b16 %v747
    %v1362 = vunpack.c.l.b16 %v748
    %v1363 = vunpack.c.h.b16 %v748
    %v1364 = vunpack.c.l.b16 %v749
    %v1365 = vunpack.c.h.b16 %v749
    %v1366 = vunpack.c.l.b16 %v750
    %v1367 = vunpack.c.h.b16 %v750
    %v1368 = vunpack.c.l.b16 %v751
    %v1369 = vunpack.c.h.b16 %v751
    %v1370 = vunpack.c.l.b16 %v752
    %v1371 = vunpack.c.h.b16 %v752
    %v1372 = vunpack.c.l.b16 %v753
    %v1373 = vunpack.c.h.b16 %v753
    %v1374 = vunpack.c.l.b16 %v754
    %v1375 = vunpack.c.h.b16 %v754
    %v1376 = vunpack.c.l.b16 %v755
    %v1377 = vunpack.c.h.b16 %v755
    %v1378 = vunpack.c.l.b16 %v756
    %v1379 = vunpack.c.h.b16 %v756
    %v1380 = vunpack.c.l.b16 %v757
    %v1381 = vunpack.c.h.b16 %v757
    %v1382 = vunpack.c.l.b16 %v758
    %v1383 = vunpack.c.h.b16 %v758
    %v1384 = vunpack.c.l.b16 %v759
    %v1385 = vunpack.c.h.b16 %v759
    %v1386 = vunpack.c.l.b16 %v760
    %v1387 = vunpack.c.h.b16 %v760
    %v1388 = vunpack.c.l.b16 %v761
    %v1389 = vunpack.c.h.b16 %v761
    %v1390 = vunpack.c.l.b16 %v762
    %v1391 = vunpack.c.h.b16 %v762
    %v1392 = vunpack.c.l.b16 %v763
    %v1393 = vunpack.c.h.b16 %v763
    %v1394 = vunpack.c.l.b16 %v764
    %v1395 = vunpack.c.h.b16 %v764
    %v1396 = vunpack.c.l.b16 %v765
    %v1397 = vunpack.c.h.b16 %v765
    %v1398 = vunpack.c.l.b16 %v766
    %v1399 = vunpack.c.h.b16 %v766
    %v1400 = vunpack.c.l.b16 %v767
    %v1401 = vunpack.c.h.b16 %v767
    %v1402 = vunpack.c.l.b16 %v768
    %v1403 = vunpack.c.h.b16 %v768
    %v1404 = vunpack.c.l.b16 %v769
    %v1405 = vunpack.c.h.b16 %v769
    %v1406 = vunpack.c.l.b16 %v770
    %v1407 = vunpack.c.h.b16 %v770
    %v1408 = vunpack.c.l.b16 %v771
    %v1409 = vunpack.c.h.b16 %v771
    %v1410 = vunpack.c.l.b16 %v772
    %v1411 = vunpack.c.h.b16 %v772
    %v1412 = vunpack.c.l.b16 %v773
    %v1413 = vunpack.c.h.b16 %v773
    %v1414 = vunpack.c.l.b16 %v774
    %v1415 = vunpack.c.h.b16 %v774
    %v1416 = vunpack.c.l.b16 %v775
    %v1417 = vunpack.c.h.b16 %v775
    %v1418 = vunpack.c.l.b16 %v776
    %v1419 = vunpack.c.h.b16 %v776
    %v1420 = vunpack.c.l.b16 %v777
    %v1421 = vunpack.c.h.b16 %v777
    %v1422 = vunpack.c.l.b16 %v778
    %v1423 = vunpack.c.h.b16 %v778
    %v1424 = vunpack.c.l.b16 %v779
    %v1425 = vunpack.c.h.b16 %v779
    %v1426 = vunpack.c.l.b16 %v780
    %v1427 = vunpack.c.h.b16 %v780
    %v1428 = vunpack.c.l.b16 %v781
    %v1429 = vunpack.c.h.b16 %v781
    %v1430 = vunpack.c.l.b16 %v782
    %v1431 = vunpack.c.h.b16 %v782
    %v1432 = vunpack.c.l.b16 %v783
    %v1433 = vunpack.c.h.b16 %v783
    %v1434 = vunpack.c.l.b16 %v784
    %v1435 = vunpack.c.h.b16 %v784
    %v1436 = vunpack.c.l.b16 %v785
    %v1437 = vunpack.c.h.b16 %v785
    %v1438 = vunpack.c.l.b16 %v786
    %v1439 = vunpack.c.h.b16 %v786
    %v1440 = vunpack.c.l.b16 %v787
    %v1441 = vunpack.c.h.b16 %v787
    %v1442 = vunpack.c.l.b16 %v788
    %v1443 = vunpack.c.h.b16 %v788
    %v1444 = vunpack.c.l.b16 %v789
    %v1445 = vunpack.c.h.b16 %v789
    %v1446 = vunpack.c.l.b16 %v790
    %v1447 = vunpack.c.h.b16 %v790
    %v1448 = vunpack.c.l.b16 %v791
    %v1449 = vunpack.c.h.b16 %v791
    %v1450 = vunpack.c.l.b16 %v792
    %v1451 = vunpack.c.h.b16 %v792
    %v1452 = vunpack.c.l.b16 %v793
    %v1453 = vunpack.c.h.b16 %v793
    %v1454 = vunpack.c.l.b16 %v794
    %v1455 = vunpack.c.h.b16 %v794
    %v1456 = vunpack.c.l.b16 %v795
    %v1457 = vunpack.c.h.b16 %v795
    %v1458 = vunpack.c.l.b16 %v796
    %v1459 = vunpack.c.h.b16 %v796
    %v1460 = vunpack.c.l.b16 %v797
    %v1461 = vunpack.c.h.b16 %v797
    %v1462 = vunpack.c.l.b16 %v798
    %v1463 = vunpack.c.h.b16 %v798
    %v1464 = vunpack.c.l.b16 %v799
    %v1465 = vunpack.c.h.b16 %v799
    %v1466 = vunpack.c.l.b16 %v800
    %v1467 = vunpack.c.h.b16 %v800
    %v1468 = vunpack.c.l.b16 %v801
    %v1469 = vunpack.c.h.b16 %v801
    %v1470 = vunpack.c.l.b16 %v802
    %v1471 = vunpack.c.h.b16 %v802
    %v1472 = vunpack.c.l.b16 %v803
    %v1473 = vunpack.c.h.b16 %v803
    %v1474 = vunpack.c.l.b16 %v804
    %v1475 = vunpack.c.h.b16 %v804
    %v1476 = vunpack.c.l.b16 %v805
    %v1477 = vunpack.c.h.b16 %v805
    %v1478 = vunpack.c.l.b16 %v806
    %v1479 = vunpack.c.h.b16 %v806
    %v1480 = vunpack.c.l.b16 %v807
    %v1481 = vunpack.c.h.b16 %v807
    %v1482 = vunpack.c.l.b16 %v808
    %v1483 = vunpack.c.h.b16 %v808
    %v1484 = vunpack.c.l.b16 %v809
    %v1485 = vunpack.c.h.b16 %v809
    %v1486 = vunpack.c.l.b16 %v810
    %v1487 = vunpack.c.h.b16 %v810
    %v1488 = vunpack.c.l.b16 %v811
    %v1489 = vunpack.c.h.b16 %v811
    %v1490 = vunpack.c.l.b16 %v812
    %v1491 = vunpack.c.h.b16 %v812
    %v1492 = vunpack.c.l.b16 %v813
    %v1493 = vunpack.c.h.b16 %v813
    %v1494 = vunpack.c.l.b16 %v814
    %v1495 = vunpack.c.h.b16 %v814
    %v1496 = vunpack.c.l.b16 %v815
    %v1497 = vunpack.c.h.b16 %v815
    %v1498 = vunpack.c.l.b16 %v816
    %v1499 = vunpack.c.h.b16 %v816
    %v1500 = vunpack.c.l.b16 %v817
    %v1501 = vunpack.c.h.b16 %v817
    %v1502 = vunpack.c.l.b16 %v818
    %v1503 = vunpack.c.h.b16 %v818
    %v1504 = vunpack.c.l.b16 %v819
    %v1505 = vunpack.c.h.b16 %v819
    %v1506 = vunpack.c.l.b16 %v820
    %v1507 = vunpack.c.h.b16 %v820
    %v1508 = vunpack.c.l.b16 %v821
    %v1509 = vunpack.c.h.b16 %v821
    %v1510 = vunpack.c.l.b16 %v822
    %v1511 = vunpack.c.h.b16 %v822
    %v1512 = vunpack.c.l.b16 %v823
    %v1513 = vunpack.c.h.b16 %v823
    %v1514 = vunpack.c.l.b16 %v824
    %v1515 = vunpack.c.h.b16 %v824
    %v1516 = vunpack.c.l.b16 %v825
    %v1517 = vunpack.c.h.b16 %v825
    %v1518 = vunpack.c.l.b16 %v826
    %v1519 = vunpack.c.h.b16 %v826
    %v1520 = vunpack.c.l.b16 %v827
    %v1521 = vunpack.c.h.b16 %v827
    %v1522 = vunpack.c.l.b16 %v828
    %v1523 = vunpack.c.h.b16 %v828
    %v1524 = vunpack.c.l.b16 %v829
    %v1525 = vunpack.c.h.b16 %v829
    %v1526 = vunpack.c.l.b16 %v830
    %v1527 = vunpack.c.h.b16 %v830
    %v1528 = vunpack.c.l.b16 %v831
    %v1529 = vunpack.c.h.b16 %v831
    %v1530 = vunpack.c.l.b16 %v832
    %v1531 = vunpack.c.h.b16 %v832
    %v1532 = vunpack.c.l.b16 %v833
    %v1533 = vunpack.c.h.b16 %v833
    %v1534 = vunpack.c.l.b16 %v834
    %v1535 = vunpack.c.h.b16 %v834
    %v1536 = vunpack.c.l.b16 %v835
    %v1537 = vunpack.c.h.b16 %v835
    %v1538 = vunpack.c.l.b16 %v836
    %v1539 = vunpack.c.h.b16 %v836
    %v1540 = vunpack.c.l.b16 %v837
    %v1541 = vunpack.c.h.b16 %v837
    %v1542 = vunpack.c.l.b16 %v838
    %v1543 = vunpack.c.h.b16 %v838
    %v1544 = vunpack.c.l.b16 %v839
    %v1545 = vunpack.c.h.b16 %v839
    %v1546 = vunpack.c.l.b16 %v840
    %v1547 = vunpack.c.h.b16 %v840
    %v1548 = vunpack.c.l.b16 %v841
    %v1549 = vunpack.c.h.b16 %v841
    %v1550 = vunpack.c.l.b16 %v842
    %v1551 = vunpack.c.h.b16 %v842
    %v1552 = vunpack.c.l.b16 %v843
    %v1553 = vunpack.c.h.b16 %v843
    %v1554 = vunpack.c.l.b16 %v844
    %v1555 = vunpack.c.h.b16 %v844
    %v1556 = vunpack.c.l.b16 %v845
    %v1557 = vunpack.c.h.b16 %v845
    %v1558 = vunpack.c.l.b16 %v846
    %v1559 = vunpack.c.h.b16 %v846
    %v1560 = vunpack.c.l.b16 %v847
    %v1561 = vunpack.c.h.b16 %v847
    %v1562 = vunpack.c.l.b16 %v848
    %v1563 = vunpack.c.h.b16 %v848
    %v1564 = vunpack.c.l.b16 %v849
    %v1565 = vunpack.c.h.b16 %v849
    %v1566 = vunpack.c.l.b16 %v850
    %v1567 = vunpack.c.h.b16 %v850
    %v1568 = vunpack.c.l.b16 %v851
    %v1569 = vunpack.c.h.b16 %v851
    %v1570 = vunpack.c.l.b16 %v852
    %v1571 = vunpack.c.h.b16 %v852
    %v1572 = vunpack.c.l.b16 %v853
    %v1573 = vunpack.c.h.b16 %v853
    %v1574 = vunpack.c.l.b16 %v854
    %v1575 = vunpack.c.h.b16 %v854
    %v1576 = vunpack.c.l.b16 %v855
    %v1577 = vunpack.c.h.b16 %v855
    %v1578 = vunpack.c.l.b16 %v856
    %v1579 = vunpack.c.h.b16 %v856
    %v1580 = vunpack.c.l.b16 %v857
    %v1581 = vunpack.c.h.b16 %v857
    %v1582 = vunpack.c.l.b16 %v858
    %v1583 = vunpack.c.h.b16 %v858
    %v1584 = vunpack.c.l.b16 %v859
    %v1585 = vunpack.c.h.b16 %v859
    %v1586 = vunpack.c.l.b16 %v860
    %v1587 = vunpack.c.h.b16 %v860
    %v1588 = vunpack.c.l.b16 %v861
    %v1589 = vunpack.c.h.b16 %v861
    %v1590 = vunpack.c.l.b16 %v862
    %v1591 = vunpack.c.h.b16 %v862
    %v1592 = vunpack.c.l.b16 %v863
    %v1593 = vunpack.c.h.b16 %v863
    %v1594 = vunpack.c.l.b16 %v864
    %v1595 = vunpack.c.h.b16 %v864
    %v1596 = vunpack.c.l.b16 %v865
    %v1597 = vunpack.c.h.b16 %v865
    %v1598 = vunpack.c.l.b16 %v866
    %v1599 = vunpack.c.h.b16 %v866
    %v1600 = vunpack.c.l.b16 %v867
    %v1601 = vunpack.c.h.b16 %v867
    %v1602 = vunpack.c.l.b16 %v868
    %v1603 = vunpack.c.h.b16 %v868
    %v1604 = vunpack.c.l.b16 %v869
    %v1605 = vunpack.c.h.b16 %v869
    %v1606 = vunpack.c.l.b16 %v870
    %v1607 = vunpack.c.h.b16 %v870
    %v1608 = vunpack.c.l.b16 %v871
    %v1609 = vunpack.c.h.b16 %v871
    %v1610 = vunpack.c.l.b16 %v872
    %v1611 = vunpack.c.h.b16 %v872
    %v1612 = vunpack.c.l.b16 %v873
    %v1613 = vunpack.c.h.b16 %v873
    %v1614 = vunpack.c.l.b16 %v874
    %v1615 = vunpack.c.h.b16 %v874
    %v1616 = vunpack.c.l.b16 %v875
    %v1617 = vunpack.c.h.b16 %v875
    %v1618 = vunpack.c.l.b16 %v876
    %v1619 = vunpack.c.h.b16 %v876
    %v1620 = vunpack.c.l.b16 %v877
    %v1621 = vunpack.c.h.b16 %v877
    %v1622 = vunpack.c.l.b16 %v878
    %v1623 = vunpack.c.h.b16 %v878
    %v1624 = vunpack.c.l.b16 %v879
    %v1625 = vunpack.c.h.b16 %v879
    %v1626 = vunpack.c.l.b16 %v880
    %v1627 = vunpack.c.h.b16 %v880
    %v1628 = vunpack.c.l.b16 %v881
    %v1629 = vunpack.c.h.b16 %v881
    %v1630 = vunpack.c.l.b16 %v882
    %v1631 = vunpack.c.h.b16 %v882
    %v1632 = vunpack.c.l.b16 %v883
    %v1633 = vunpack.c.h.b16 %v883
    %v1634 = vunpack.c.l.b16 %v884
    %v1635 = vunpack.c.h.b16 %v884
    %v1636 = vunpack.c.l.b16 %v885
    %v1637 = vunpack.c.h.b16 %v885
    %v1638 = vunpack.c.l.b16 %v886
    %v1639 = vunpack.c.h.b16 %v886
    %v1640 = vunpack.c.l.b16 %v887
    %v1641 = vunpack.c.h.b16 %v887
    %v1642 = vunpack.c.l.b16 %v888
    %v1643 = vunpack.c.h.b16 %v888
    %v1644 = vunpack.c.l.b16 %v889
    %v1645 = vunpack.c.h.b16 %v889
    %v1646 = vunpack.c.l.b16 %v890
    %v1647 = vunpack.c.h.b16 %v890
    %v1648 = vunpack.c.l.b16 %v891
    %v1649 = vunpack.c.h.b16 %v891
    %v1650 = vunpack.c.l.b16 %v892
    %v1651 = vunpack.c.h.b16 %v892
    %v1652 = vunpack.c.l.b16 %v893
    %v1653 = vunpack.c.h.b16 %v893
    %v1654 = vunpack.c.l.b16 %v894
    %v1655 = vunpack.c.h.b16 %v894
    %v1656 = vunpack.c.l.b16 %v895
    %v1657 = vunpack.c.h.b16 %v895
    %v1658 = vunpack.c.l.b16 %v896
    %v1659 = vunpack.c.h.b16 %v896
    %v1660 = vunpack.c.l.b16 %v897
    %v1661 = vunpack.c.h.b16 %v897
    %v1662 = vunpack.c.l.b16 %v898
    %v1663 = vunpack.c.h.b16 %v898
    %v1664 = vunpack.c.l.b16 %v899
    %v1665 = vunpack.c.h.b16 %v899
    %v1666 = vunpack.c.l.b16 %v900
    %v1667 = vunpack.c.h.b16 %v900
    %v1668 = vunpack.c.l.b16 %v901
    %v1669 = vunpack.c.h.b16 %v901
    %v1670 = vunpack.c.l.b16 %v902
    %v1671 = vunpack.c.h.b16 %v902
    %v1672 = vunpack.c.l.b16 %v903
    %v1673 = vunpack.c.h.b16 %v903
    %v1674 = vunpack.c.l.b16 %v904
    %v1675 = vunpack.c.h.b16 %v904
    %v1676 = vunpack.c.l.b16 %v905
    %v1677 = vunpack.c.h.b16 %v905
    %v1678 = vunpack.c.l.b16 %v906
    %v1679 = vunpack.c.h.b16 %v906
    %v1680 = vunpack.c.l.b16 %v907
    %v1681 = vunpack.c.h.b16 %v907
    %v1682 = vunpack.c.l.b16 %v908
    %v1683 = vunpack.c.h.b16 %v908
    %v1684 = vunpack.c.l.b16 %v909
    %v1685 = vunpack.c.h.b16 %v909
    %v1686 = vunpack.c.l.b16 %v910
    %v1687 = vunpack.c.h.b16 %v910
    %v1688 = vunpack.c.l.b16 %v911
    %v1689 = vunpack.c.h.b16 %v911
    %v1690 = vunpack.c.l.b16 %v912
    %v1691 = vunpack.c.h.b16 %v912
    %v1692 = vunpack.c.l.b16 %v913
    %v1693 = vunpack.c.h.b16 %v913
    %v1694 = vunpack.c.l.b16 %v914
    %v1695 = vunpack.c.h.b16 %v914
    %v1696 = vunpack.c.l.b16 %v915
    %v1697 = vunpack.c.h.b16 %v915
    %v1698 = vunpack.c.l.b16 %v916
    %v1699 = vunpack.c.h.b16 %v916
    %v1700 = vunpack.c.l.b16 %v917
    %v1701 = vunpack.c.h.b16 %v917
    %v1702 = vunpack.c.l.b16 %v918
    %v1703 = vunpack.c.h.b16 %v918
    %v1704 = vunpack.c.l.b16 %v919
    %v1705 = vunpack.c.h.b16 %v919
    %v1706 = vunpack.c.l.b16 %v920
    %v1707 = vunpack.c.h.b16 %v920
    %v1708 = vunpack.c.l.b16 %v921
    %v1709 = vunpack.c.h.b16 %v921
    %v1710 = vunpack.c.l.b16 %v922
    %v1711 = vunpack.c.h.b16 %v922
    %v1712 = vunpack.c.l.b16 %v923
    %v1713 = vunpack.c.h.b16 %v923
    %v1714 = vpack.c.b16 %v1206, %v1202
    %v1715 = vpack.c.b16 %v1207, %v1203
    %v1716 = vpack.c.b16 %v1208, %v1204
    %v1717 = vpack.c.b16 %v1209, %v1205
    %v1718 = vpack.c.b16 %v1214, %v1210
    %v1719 = vpack.c.b16 %v1215, %v1211
    %v1720 = vpack.c.b16 %v1216, %v1212
    %v1721 = vpack.c.b16 %v1217, %v1213
    %v1722 = vpack.c.b16 %v1222, %v1218
    %v1723 = vpack.c.b16 %v1223, %v1219
    %v1724 = vpack.c.b16 %v1224, %v1220
    %v1725 = vpack.c.b16 %v1225, %v1221
    %v1726 = vpack.c.b16 %v1230, %v1226
    %v1727 = vpack.c.b16 %v1231, %v1227
    %v1728 = vpack.c.b16 %v1232, %v1228
    %v1729 = vpack.c.b16 %v1233, %v1229
    %v1730 = vpack.c.b16 %v1238, %v1234
    %v1731 = vpack.c.b16 %v1239, %v1235
    %v1732 = vpack.c.b16 %v1240, %v1236
    %v1733 = vpack.c.b16 %v1241, %v1237
    %v1734 = vpack.c.b16 %v1246, %v1242
    %v1735 = vpack.c.b16 %v1247, %v1243
    %v1736 = vpack.c.b16 %v1248, %v1244
    %v1737 = vpack.c.b16 %v1249, %v1245
    %v1738 = vpack.c.b16 %v1254, %v1250
    %v1739 = vpack.c.b16 %v1255, %v1251
    %v1740 = vpack.c.b16 %v1256, %v1252
    %v1741 = vpack.c.b16 %v1257, %v1253
    %v1742 = vpack.c.b16 %v1262, %v1258
    %v1743 = vpack.c.b16 %v1263, %v1259
    %v1744 = vpack.c.b16 %v1264, %v1260
    %v1745 = vpack.c.b16 %v1265, %v1261
    %v1746 = vpack.c.b16 %v1270, %v1266
    %v1747 = vpack.c.b16 %v1271, %v1267
    %v1748 = vpack.c.b16 %v1272, %v1268
    %v1749 = vpack.c.b16 %v1273, %v1269
    %v1750 = vpack.c.b16 %v1278, %v1274
    %v1751 = vpack.c.b16 %v1279, %v1275
    %v1752 = vpack.c.b16 %v1280, %v1276
    %v1753 = vpack.c.b16 %v1281, %v1277
    %v1754 = vpack.c.b16 %v1286, %v1282
    %v1755 = vpack.c.b16 %v1287, %v1283
    %v1756 = vpack.c.b16 %v1288, %v1284
    %v1757 = vpack.c.b16 %v1289, %v1285
    %v1758 = vpack.c.b16 %v1294, %v1290
    %v1759 = vpack.c.b16 %v1295, %v1291
    %v1760 = vpack.c.b16 %v1296, %v1292
    %v1761 = vpack.c.b16 %v1297, %v1293
    %v1762 = vpack.c.b16 %v1302, %v1298
    %v1763 = vpack.c.b16 %v1303, %v1299
    %v1764 = vpack.c.b16 %v1304, %v1300
    %v1765 = vpack.c.b16 %v1305, %v1301
    %v1766 = vpack.c.b16 %v1310, %v1306
    %v1767 = vpack.c.b16 %v1311, %v1307
    %v1768 = vpack.c.b16 %v1312, %v1308
    %v1769 = vpack.c.b16 %v1313, %v1309
    %v1770 = vpack.c.b16 %v1318, %v1314
    %v1771 = vpack.c.b16 %v1319, %v1315
    %v1772 = vpack.c.b16 %v1320, %v1316
    %v1773 = vpack.c.b16 %v1321, %v1317
    %v1774 = vpack.c.b16 %v1326, %v1322
    %v1775 = vpack.c.b16 %v1327, %v1323
    %v1776 = vpack.c.b16 %v1328, %v1324
    %v1777 = vpack.c.b16 %v1329, %v1325
    %v1778 = vpack.c.b16 %v1334, %v1330
    %v1779 = vpack.c.b16 %v1335, %v1331
    %v1780 = vpack.c.b16 %v1336, %v1332
    %v1781 = vpack.c.b16 %v1337, %v1333
    %v1782 = vpack.c.b16 %v1342, %v1338
    %v1783 = vpack.c.b16 %v1343, %v1339
    %v1784 = vpack.c.b16 %v1344, %v1340
    %v1785 = vpack.c.b16 %v1345, %v1341
    %v1786 = vpack.c.b16 %v1350, %v1346
    %v1787 = vpack.c.b16 %v1351, %v1347
    %v1788 = vpack.c.b16 %v1352, %v1348
    %v1789 = vpack.c.b16 %v1353, %v1349
    %v1790 = vpack.c.b16 %v1358, %v1354
    %v1791 = vpack.c.b16 %v1359, %v1355
    %v1792 = vpack.c.b16 %v1360, %v1356
    %v1793 = vpack.c.b16 %v1361, %v1357
    %v1794 = vpack.c.b16 %v1366, %v1362
    %v1795 = vpack.c.b16 %v1367, %v1363
    %v1796 = vpack.c.b16 %v1368, %v1364
    %v1797 = vpack.c.b16 %v1369, %v1365
    %v1798 = vpack.c.b16 %v1374, %v1370
    %v1799 = vpack.c.b16 %v1375, %v1371
    %v1800 = vpack.c.b16 %v1376, %v1372
    %v1801 = vpack.c.b16 %v1377, %v1373
    %v1802 = vpack.c.b16 %v1382, %v1378
    %v1803 = vpack.c.b16 %v1383, %v1379
    %v1804 = vpack.c.b16 %v1384, %v1380
    %v1805 = vpack.c.b16 %v1385, %v1381
    %v1806 = vpack.c.b16 %v1390, %v1386
    %v1807 = vpack.c.b16 %v1391, %v1387
    %v1808 = vpack.c.b16 %v1392, %v1388
    %v1809 = vpack.c.b16 %v1393, %v1389
    %v1810 = vpack.c.b16 %v1398, %v1394
    %v1811 = vpack.c.b16 %v1399, %v1395
    %v1812 = vpack.c.b16 %v1400, %v1396
    %v1813 = vpack.c.b16 %v1401, %v1397
    %v1814 = vpack.c.b16 %v1406, %v1402
    %v1815 = vpack.c.b16 %v1407, %v1403
    %v1816 = vpack.c.b16 %v1408, %v1404
    %v1817 = vpack.c.b16 %v1409, %v1405
    %v1818 = vpack.c.b16 %v1414, %v1410
    %v1819 = vpack.c.b16 %v1415, %v1411
    %v1820 = vpack.c.b16 %v1416, %v1412
    %v1821 = vpack.c.b16 %v1417, %v1413
    %v1822 = vpack.c.b16 %v1422, %v1418
    %v1823 = vpack.c.b16 %v1423, %v1419
    %v1824 = vpack.c.b16 %v1424, %v1420
    %v1825 = vpack.c.b16 %v1425, %v1421
    %v1826 = vpack.c.b16 %v1430, %v1426
    %v1827 = vpack.c.b16 %v1431, %v1427
    %v1828 = vpack.c.b16 %v1432, %v1428
    %v1829 = vpack.c.b16 %v1433, %v1429
    %v1830 = vpack.c.b16 %v1438, %v1434
    %v1831 = vpack.c.b16 %v1439, %v1435
    %v1832 = vpack.c.b16 %v1440, %v1436
    %v1833 = vpack.c.b16 %v1441, %v1437
    %v1834 = vpack.c.b16 %v1446, %v1442
    %v1835 = vpack.c.b16 %v1447, %v1443
    %v1836 = vpack.c.b16 %v1448, %v1444
    %v1837 = vpack.c.b16 %v1449, %v1445
    %v1838 = vpack.c.b16 %v1454, %v1450
    %v1839 = vpack.c.b16 %v1455, %v1451
    %v1840 = vpack.c.b16 %v1456, %v1452
    %v1841 = vpack.c.b16 %v1457, %v1453
    %v1842 = vpack.c.b16 %v1462, %v1458
    %v1843 = vpack.c.b16 %v1463, %v1459
    %v1844 = vpack.c.b16 %v1464, %v1460
    %v1845 = vpack.c.b16 %v1465, %v1461
    %v1846 = vpack.c.b16 %v1470, %v1466
    %v1847 = vpack.c.b16 %v1471, %v1467
    %v1848 = vpack.c.b16 %v1472, %v1468
    %v1849 = vpack.c.b16 %v1473, %v1469
    %v1850 = vpack.c.b16 %v1478, %v1474
    %v1851 = vpack.c.b16 %v1479, %v1475
    %v1852 = vpack.c.b16 %v1480, %v1476
    %v1853 = vpack.c.b16 %v1481, %v1477
    %v1854 = vpack.c.b16 %v1486, %v1482
    %v1855 = vpack.c.b16 %v1487, %v1483
    %v1856 = vpack.c.b16 %v1488, %v1484
    %v1857 = vpack.c.b16 %v1489, %v1485
    %v1858 = vpack.c.b16 %v1494, %v1490
    %v1859 = vpack.c.b16 %v1495, %v1491
    %v1860 = vpack.c.b16 %v1496, %v1492
    %v1861 = vpack.c.b16 %v1497, %v1493
    %v1862 = vpack.c.b16 %v1502, %v1498
    %v1863 = vpack.c.b16 %v1503, %v1499
    %v1864 = vpack.c.b16 %v1504, %v1500
    %v1865 = vpack.c.b16 %v1505, %v1501
    %v1866 = vpack.c.b16 %v1510, %v1506
    %v1867 = vpack.c.b16 %v1511, %v1507
    %v1868 = vpack.c.b16 %v1512, %v1508
    %v1869 = vpack.c.b16 %v1513, %v1509
    %v1870 = vpack.c.b16 %v1518, %v1514
    %v1871 = vpack.c.b16 %v1519, %v1515
    %v1872 = vpack.c.b16 %v1520, %v1516
    %v1873 = vpack.c.b16 %v1521, %v1517
    %v1874 = vpack.c.b16 %v1526, %v1522
    %v1875 = vpack.c.b16 %v1527, %v1523
    %v1876 = vpack.c.b16 %v1528, %v1524
    %v1877 = vpack.c.b16 %v1529, %v1525
    %v1878 = vpack.c.b16 %v1534, %v1530
    %v1879 = vpack.c.b16 %v1535, %v1531
    %v1880 = vpack.c.b16 %v1536, %v1532
    %v1881 = vpack.c.b16 %v1537, %v1533
    %v1882 = vpack.c.b16 %v1542, %v1538
    %v1883 = vpack.c.b16 %v1543, %v1539
    %v1884 = vpack.c.b16 %v1544, %v1540
    %v1885 = vpack.c.b16 %v1545, %v1541
    %v1886 = vpack.c.b16 %v1550, %v1546
    %v1887 = vpack.c.b16 %v1551, %v1547
    %v1888 = vpack.c.b16 %v1552, %v1548
    %v1889 = vpack.c.b16 %v1553, %v1549
    %v1890 = vpack.c.b16 %v1558, %v1554
    %v1891 = vpack.c.b16 %v1559, %v1555
    %v1892 = vpack.c.b16 %v1560, %v1556
    %v1893 = vpack.c.b16 %v1561, %v1557
    %v1894 = vpack.c.b16 %v1566, %v1562
    %v1895 = vpack.c.b16 %v1567, %v1563
    %v1896 = vpack.c.b16 %v1568, %v1564
    %v1897 = vpack.c.b16 %v1569, %v1565
    %v1898 = vpack.c.b16 %v1574, %v1570
    %v1899 = vpack.c.b16 %v1575, %v1571
    %v1900 = vpack.c.b16 %v1576, %v1572
    %v1901 = vpack.c.b16 %v1577, %v1573
    %v1902 = vpack.c.b16 %v1582, %v1578
    %v1903 = vpack.c.b16 %v1583, %v1579
    %v1904 = vpack.c.b16 %v1584, %v1580
    %v1905 = vpack.c.b16 %v1585, %v1581
    %v1906 = vpack.c.b16 %v1590, %v1586
    %v1907 = vpack.c.b16 %v1591, %v1587
    %v1908 = vpack.c.b16 %v1592, %v1588
    %v1909 = vpack.c.b16 %v1593, %v1589
    %v1910 = vpack.c.b16 %v1598, %v1594
    %v1911 = vpack.c.b16 %v1599, %v1595
    %v1912 = vpack.c.b16 %v1600, %v1596
    %v1913 = vpack.c.b16 %v1601, %v1597
    %v1914 = vpack.c.b16 %v1606, %v1602
    %v1915 = vpack.c.b16 %v1607, %v1603
    %v1916 = vpack.c.b16 %v1608, %v1604
    %v1917 = vpack.c.b16 %v1609, %v1605
    %v1918 = vpack.c.b16 %v1614, %v1610
    %v1919 = vpack.c.b16 %v1615, %v1611
    %v1920 = vpack.c.b16 %v1616, %v1612
    %v1921 = vpack.c.b16 %v1617, %v1613
    %v1922 = vpack.c.b16 %v1622, %v1618
    %v1923 = vpack.c.b16 %v1623, %v1619
    %v1924 = vpack.c.b16 %v1624, %v1620
    %v1925 = vpack.c.b16 %v1625, %v1621
    %v1926 = vpack.c.b16 %v1630, %v1626
    %v1927 = vpack.c.b16 %v1631, %v1627
    %v1928 = vpack.c.b16 %v1632, %v1628
    %v1929 = vpack.c.b16 %v1633, %v1629
    %v1930 = vpack.c.b16 %v1638, %v1634
    %v1931 = vpack.c.b16 %v1639, %v1635
    %v1932 = vpack.c.b16 %v1640, %v1636
    %v1933 = vpack.c.b16 %v1641, %v1637
    %v1934 = vpack.c.b16 %v1646, %v1642
    %v1935 = vpack.c.b16 %v1647, %v1643
    %v1936 = vpack.c.b16 %v1648, %v1644
    %v1937 = vpack.c.b16 %v1649, %v1645
    %v1938 = vpack.c.b16 %v1654, %v1650
    %v1939 = vpack.c.b16 %v1655, %v1651
    %v1940 = vpack.c.b16 %v1656, %v1652
    %v1941 = vpack.c.b16 %v1657, %v1653
    %v1942 = vpack.c.b16 %v1662, %v1658
    %v1943 = vpack.c.b16 %v1663, %v1659
    %v1944 = vpack.c.b16 %v1664, %v1660
    %v1945 = vpack.c.b16 %v1665, %v1661
    %v1946 = vpack.c.b16 %v1670, %v1666
    %v1947 = vpack.c.b16 %v1671, %v1667
    %v1948 = vpack.c.b16 %v1672, %v1668
    %v1949 = vpack.c.b16 %v1673, %v1669
    %v1950 = vpack.c.b16 %v1678, %v1674
    %v1951 = vpack.c.b16 %v1679, %v1675
    %v1952 = vpack.c.b16 %v1680, %v1676
    %v1953 = vpack.c.b16 %v1681, %v1677
    %v1954 = vpack.c.b16 %v1686, %v1682
    %v1955 = vpack.c.b16 %v1687, %v1683
    %v1956 = vpack.c.b16 %v1688, %v1684
    %v1957 = vpack.c.b16 %v1689, %v1685
    %v1958 = vpack.c.b16 %v1694, %v1690
    %v1959 = vpack.c.b16 %v1695, %v1691
    %v1960 = vpack.c.b16 %v1696, %v1692
    %v1961 = vpack.c.b16 %v1697, %v1693
    %v1962 = vpack.c.b16 %v1702, %v1698
    %v1963 = vpack.c.b16 %v1703, %v1699
    %v1964 = vpack.c.b16 %v1704, %v1700
    %v1965 = vpack.c.b16 %v1705, %v1701
    %v1966 = vpack.c.b16 %v1710, %v1706
    %v1967 = vpack.c.b16 %v1711, %v1707
    %v1968 = vpack.c.b16 %v1712, %v1708
    %v1969 = vpack.c.b16 %v1713, %v1709
    %2226 = vmatprep.subr.bf16.mxu0 %v1743
    %2227 = vmatpush1.bf16.msra.mxu0 %v1742
    %2228 = vmatprep.subr.bf16.mxu0 %v1739
    %2229 = vmatpush1.bf16.msra.mxu0 %v1738
    %2230 = vmatprep.subr.bf16.mxu0 %v1735
    %2231 = vmatpush1.bf16.msra.mxu0 %v1734
    %2232 = vmatprep.subr.bf16.mxu0 %v1731
    %2233 = vmatpush1.bf16.msra.mxu0 %v1730
    %2234 = vmatprep.subr.bf16.mxu0 %v1727
    %2235 = vmatpush1.bf16.msra.mxu0 %v1726
    %2236 = vmatprep.subr.bf16.mxu0 %v1723
    %2237 = vmatpush1.bf16.msra.mxu0 %v1722
    %2238 = vmatprep.subr.bf16.mxu0 %v1719
    %2239 = vmatpush1.bf16.msra.mxu0 %v1718
    %2240 = vmatprep.subr.bf16.mxu0 %v1715
    %2241 = vmatpush1.bf16.msra.mxu0 %v1714
    %2242 = vmatprep.subr.bf16.mxu0 %v1775
    %2243 = vmatpush2.bf16.msra.mxu0 %v1774
    %2244 = vmatprep.subr.bf16.mxu0 %v1771
    %2245 = vmatpush2.bf16.msra.mxu0 %v1770
    %2246 = vmatprep.subr.bf16.mxu0 %v1767
    %2247 = vmatpush2.bf16.msra.mxu0 %v1766
    %2248 = vmatprep.subr.bf16.mxu0 %v1763
    %2249 = vmatpush2.bf16.msra.mxu0 %v1762
    %2250 = vmatprep.subr.bf16.mxu0 %v1759
    %2251 = vmatpush2.bf16.msra.mxu0 %v1758
    %2252 = vmatprep.subr.bf16.mxu0 %v1755
    %2253 = vmatpush2.bf16.msra.mxu0 %v1754
    %2254 = vmatprep.subr.bf16.mxu0 %v1751
    %2255 = vmatpush2.bf16.msra.mxu0 %v1750
    %2256 = vmatprep.subr.bf16.mxu0 %v1747
    %2257 = vmatpush2.bf16.msra.mxu0 %v1746
    %2258 = vmatprep.mubr.bf16.mxu0 %v661
    %2259 = vmatmul.mubr.bf16.gmra.mxu0 %v660
    %v2260 = vpop.f32.mrf.mxu0
    %v2261 = vadd.f32 %v929, %v2260
    %v2262 = vpop.f32.mrf.mxu0
    %v2263 = vadd.f32 %v933, %v2262
    %v2264 = vpop.f32.mrf.mxu0
    %v2265 = vpop.f32.mrf.mxu0
    %2266 = vdwg.mxu0
    %2267 = vmatprep.subr.bf16.mxu0 %v1807
    %2268 = vmatpush1.bf16.msra.mxu0 %v1806
    %2269 = vmatprep.subr.bf16.mxu0 %v1803
    %2270 = vmatpush1.bf16.msra.mxu0 %v1802
    %2271 = vmatprep.subr.bf16.mxu0 %v1799
    %2272 = vmatpush1.bf16.msra.mxu0 %v1798
    %2273 = vmatprep.subr.bf16.mxu0 %v1795
    %2274 = vmatpush1.bf16.msra.mxu0 %v1794
    %2275 = vmatprep.subr.bf16.mxu0 %v1791
    %2276 = vmatpush1.bf16.msra.mxu0 %v1790
    %2277 = vmatprep.subr.bf16.mxu0 %v1787
    %2278 = vmatpush1.bf16.msra.mxu0 %v1786
    %2279 = vmatprep.subr.bf16.mxu0 %v1783
    %2280 = vmatpush1.bf16.msra.mxu0 %v1782
    %2281 = vmatprep.subr.bf16.mxu0 %v1779
    %2282 = vmatpush1.bf16.msra.mxu0 %v1778
    %2283 = vmatprep.subr.bf16.mxu0 %v1839
    %2284 = vmatpush2.bf16.msra.mxu0 %v1838
    %2285 = vmatprep.subr.bf16.mxu0 %v1835
    %2286 = vmatpush2.bf16.msra.mxu0 %v1834
    %2287 = vmatprep.subr.bf16.mxu0 %v1831
    %2288 = vmatpush2.bf16.msra.mxu0 %v1830
    %2289 = vmatprep.subr.bf16.mxu0 %v1827
    %2290 = vmatpush2.bf16.msra.mxu0 %v1826
    %2291 = vmatprep.subr.bf16.mxu0 %v1823
    %2292 = vmatpush2.bf16.msra.mxu0 %v1822
    %2293 = vmatprep.subr.bf16.mxu0 %v1819
    %2294 = vmatpush2.bf16.msra.mxu0 %v1818
    %2295 = vmatprep.subr.bf16.mxu0 %v1815
    %2296 = vmatpush2.bf16.msra.mxu0 %v1814
    %2297 = vmatprep.subr.bf16.mxu0 %v1811
    %2298 = vmatpush2.bf16.msra.mxu0 %v1810
    %2299 = vmatprep.mubr.bf16.mxu0 %v663
    %2300 = vmatmul.mubr.bf16.gmra.mxu0 %v662
    %v2301 = vpop.f32.mrf.mxu0
    %v2302 = vadd.f32 %v2261, %v2301
    %v2303 = vpop.f32.mrf.mxu0
    %v2304 = vadd.f32 %v2263, %v2303
    %v2305 = vpop.f32.mrf.mxu0
    %v2306 = vpop.f32.mrf.mxu0
    %2307 = vdwg.mxu0
    %2308 = vmatprep.subr.bf16.mxu0 %v1871
    %2309 = vmatpush1.bf16.msra.mxu0 %v1870
    %2310 = vmatprep.subr.bf16.mxu0 %v1867
    %2311 = vmatpush1.bf16.msra.mxu0 %v1866
    %2312 = vmatprep.subr.bf16.mxu0 %v1863
    %2313 = vmatpush1.bf16.msra.mxu0 %v1862
    %2314 = vmatprep.subr.bf16.mxu0 %v1859
    %2315 = vmatpush1.bf16.msra.mxu0 %v1858
    %2316 = vmatprep.subr.bf16.mxu0 %v1855
    %2317 = vmatpush1.bf16.msra.mxu0 %v1854
    %2318 = vmatprep.subr.bf16.mxu0 %v1851
    %2319 = vmatpush1.bf16.msra.mxu0 %v1850
    %2320 = vmatprep.subr.bf16.mxu0 %v1847
    %2321 = vmatpush1.bf16.msra.mxu0 %v1846
    %2322 = vmatprep.subr.bf16.mxu0 %v1843
    %2323 = vmatpush1.bf16.msra.mxu0 %v1842
    %2324 = vmatprep.subr.bf16.mxu0 %v1903
    %2325 = vmatpush2.bf16.msra.mxu0 %v1902
    %2326 = vmatprep.subr.bf16.mxu0 %v1899
    %2327 = vmatpush2.bf16.msra.mxu0 %v1898
    %2328 = vmatprep.subr.bf16.mxu0 %v1895
    %2329 = vmatpush2.bf16.msra.mxu0 %v1894
    %2330 = vmatprep.subr.bf16.mxu0 %v1891
    %2331 = vmatpush2.bf16.msra.mxu0 %v1890
    %2332 = vmatprep.subr.bf16.mxu0 %v1887
    %2333 = vmatpush2.bf16.msra.mxu0 %v1886
    %2334 = vmatprep.subr.bf16.mxu0 %v1883
    %2335 = vmatpush2.bf16.msra.mxu0 %v1882
    %2336 = vmatprep.subr.bf16.mxu0 %v1879
    %2337 = vmatpush2.bf16.msra.mxu0 %v1878
    %2338 = vmatprep.subr.bf16.mxu0 %v1875
    %2339 = vmatpush2.bf16.msra.mxu0 %v1874
    %2340 = vmatprep.mubr.bf16.mxu0 %v665
    %2341 = vmatmul.mubr.bf16.gmra.mxu0 %v664
    %v2342 = vpop.f32.mrf.mxu0
    %v2343 = vadd.f32 %v2302, %v2342
    %v2344 = vpop.f32.mrf.mxu0
    %v2345 = vadd.f32 %v2304, %v2344
    %v2346 = vpop.f32.mrf.mxu0
    %v2347 = vpop.f32.mrf.mxu0
    %2348 = vdwg.mxu0
    %2349 = vmatprep.subr.bf16.mxu0 %v1935
    %2350 = vmatpush1.bf16.msra.mxu0 %v1934
    %2351 = vmatprep.subr.bf16.mxu0 %v1931
    %2352 = vmatpush1.bf16.msra.mxu0 %v1930
    %2353 = vmatprep.subr.bf16.mxu0 %v1927
    %2354 = vmatpush1.bf16.msra.mxu0 %v1926
    %2355 = vmatprep.subr.bf16.mxu0 %v1923
    %2356 = vmatpush1.bf16.msra.mxu0 %v1922
    %2357 = vmatprep.subr.bf16.mxu0 %v1919
    %2358 = vmatpush1.bf16.msra.mxu0 %v1918
    %2359 = vmatprep.subr.bf16.mxu0 %v1915
    %2360 = vmatpush1.bf16.msra.mxu0 %v1914
    %2361 = vmatprep.subr.bf16.mxu0 %v1911
    %2362 = vmatpush1.bf16.msra.mxu0 %v1910
    %2363 = vmatprep.subr.bf16.mxu0 %v1907
    %2364 = vmatpush1.bf16.msra.mxu0 %v1906
    %2365 = vmatprep.subr.bf16.mxu0 %v1967
    %2366 = vmatpush2.bf16.msra.mxu0 %v1966
    %2367 = vmatprep.subr.bf16.mxu0 %v1963
    %2368 = vmatpush2.bf16.msra.mxu0 %v1962
    %2369 = vmatprep.subr.bf16.mxu0 %v1959
    %2370 = vmatpush2.bf16.msra.mxu0 %v1958
    %2371 = vmatprep.subr.bf16.mxu0 %v1955
    %2372 = vmatpush2.bf16.msra.mxu0 %v1954
    %2373 = vmatprep.subr.bf16.mxu0 %v1951
    %2374 = vmatpush2.bf16.msra.mxu0 %v1950
    %2375 = vmatprep.subr.bf16.mxu0 %v1947
    %2376 = vmatpush2.bf16.msra.mxu0 %v1946
    %2377 = vmatprep.subr.bf16.mxu0 %v1943
    %2378 = vmatpush2.bf16.msra.mxu0 %v1942
    %2379 = vmatprep.subr.bf16.mxu0 %v1939
    %2380 = vmatpush2.bf16.msra.mxu0 %v1938
    %2381 = vmatprep.mubr.bf16.mxu0 %v667
    %2382 = vmatmul.mubr.bf16.gmra.mxu0 %v666
    %v2383 = vpop.f32.mrf.mxu0
    %v2384 = vadd.f32 %v2343, %v2383
    %v2385 = vpop.f32.mrf.mxu0
    %v2386 = vadd.f32 %v2345, %v2385
    %v2387 = vpop.f32.mrf.mxu0
    %v2388 = vpop.f32.mrf.mxu0
    %2389 = vdwg.mxu0
    %2390 = vmatprep.subr.bf16.mxu0 %v1745
    %2391 = vmatpush1.bf16.msra.mxu0 %v1744
    %2392 = vmatprep.subr.bf16.mxu0 %v1741
    %2393 = vmatpush1.bf16.msra.mxu0 %v1740
    %2394 = vmatprep.subr.bf16.mxu0 %v1737
    %2395 = vmatpush1.bf16.msra.mxu0 %v1736
    %2396 = vmatprep.subr.bf16.mxu0 %v1733
    %2397 = vmatpush1.bf16.msra.mxu0 %v1732
    %2398 = vmatprep.subr.bf16.mxu0 %v1729
    %2399 = vmatpush1.bf16.msra.mxu0 %v1728
    %2400 = vmatprep.subr.bf16.mxu0 %v1725
    %2401 = vmatpush1.bf16.msra.mxu0 %v1724
    %2402 = vmatprep.subr.bf16.mxu0 %v1721
    %2403 = vmatpush1.bf16.msra.mxu0 %v1720
    %2404 = vmatprep.subr.bf16.mxu0 %v1717
    %2405 = vmatpush1.bf16.msra.mxu0 %v1716
    %2406 = vmatprep.subr.bf16.mxu0 %v1777
    %2407 = vmatpush2.bf16.msra.mxu0 %v1776
    %2408 = vmatprep.subr.bf16.mxu0 %v1773
    %2409 = vmatpush2.bf16.msra.mxu0 %v1772
    %2410 = vmatprep.subr.bf16.mxu0 %v1769
    %2411 = vmatpush2.bf16.msra.mxu0 %v1768
    %2412 = vmatprep.subr.bf16.mxu0 %v1765
    %2413 = vmatpush2.bf16.msra.mxu0 %v1764
    %2414 = vmatprep.subr.bf16.mxu0 %v1761
    %2415 = vmatpush2.bf16.msra.mxu0 %v1760
    %2416 = vmatprep.subr.bf16.mxu0 %v1757
    %2417 = vmatpush2.bf16.msra.mxu0 %v1756
    %2418 = vmatprep.subr.bf16.mxu0 %v1753
    %2419 = vmatpush2.bf16.msra.mxu0 %v1752
    %2420 = vmatprep.subr.bf16.mxu0 %v1749
    %2421 = vmatpush2.bf16.msra.mxu0 %v1748
    %2422 = vmatprep.mubr.bf16.mxu0 %v661
    %2423 = vmatmul.mubr.bf16.gmra.mxu0 %v660
    %v2424 = vpop.f32.mrf.mxu0
    %v2425 = vadd.f32 %v937, %v2424
    %v2426 = vpop.f32.mrf.mxu0
    %v2427 = vadd.f32 %v941, %v2426
    %v2428 = vpop.f32.mrf.mxu0
    %v2429 = vpop.f32.mrf.mxu0
    %2430 = vdwg.mxu0
    %2431 = vmatprep.subr.bf16.mxu0 %v1809
    %2432 = vmatpush1.bf16.msra.mxu0 %v1808
    %2433 = vmatprep.subr.bf16.mxu0 %v1805
    %2434 = vmatpush1.bf16.msra.mxu0 %v1804
    %2435 = vmatprep.subr.bf16.mxu0 %v1801
    %2436 = vmatpush1.bf16.msra.mxu0 %v1800
    %2437 = vmatprep.subr.bf16.mxu0 %v1797
    %2438 = vmatpush1.bf16.msra.mxu0 %v1796
    %2439 = vmatprep.subr.bf16.mxu0 %v1793
    %2440 = vmatpush1.bf16.msra.mxu0 %v1792
    %2441 = vmatprep.subr.bf16.mxu0 %v1789
    %2442 = vmatpush1.bf16.msra.mxu0 %v1788
    %2443 = vmatprep.subr.bf16.mxu0 %v1785
    %2444 = vmatpush1.bf16.msra.mxu0 %v1784
    %2445 = vmatprep.subr.bf16.mxu0 %v1781
    %2446 = vmatpush1.bf16.msra.mxu0 %v1780
    %2447 = vmatprep.subr.bf16.mxu0 %v1841
    %2448 = vmatpush2.bf16.msra.mxu0 %v1840
    %2449 = vmatprep.subr.bf16.mxu0 %v1837
    %2450 = vmatpush2.bf16.msra.mxu0 %v1836
    %2451 = vmatprep.subr.bf16.mxu0 %v1833
    %2452 = vmatpush2.bf16.msra.mxu0 %v1832
    %2453 = vmatprep.subr.bf16.mxu0 %v1829
    %2454 = vmatpush2.bf16.msra.mxu0 %v1828
    %2455 = vmatprep.subr.bf16.mxu0 %v1825
    %2456 = vmatpush2.bf16.msra.mxu0 %v1824
    %2457 = vmatprep.subr.bf16.mxu0 %v1821
    %2458 = vmatpush2.bf16.msra.mxu0 %v1820
    %2459 = vmatprep.subr.bf16.mxu0 %v1817
    %2460 = vmatpush2.bf16.msra.mxu0 %v1816
    %2461 = vmatprep.subr.bf16.mxu0 %v1813
    %2462 = vmatpush2.bf16.msra.mxu0 %v1812
    %2463 = vmatprep.mubr.bf16.mxu0 %v663
    %2464 = vmatmul.mubr.bf16.gmra.mxu0 %v662
    %v2465 = vpop.f32.mrf.mxu0
    %v2466 = vadd.f32 %v2425, %v2465
    %v2467 = vpop.f32.mrf.mxu0
    %v2468 = vadd.f32 %v2427, %v2467
    %v2469 = vpop.f32.mrf.mxu0
    %v2470 = vpop.f32.mrf.mxu0
    %2471 = vdwg.mxu0
    %2472 = vmatprep.subr.bf16.mxu0 %v1873
    %2473 = vmatpush1.bf16.msra.mxu0 %v1872
    %2474 = vmatprep.subr.bf16.mxu0 %v1869
    %2475 = vmatpush1.bf16.msra.mxu0 %v1868
    %2476 = vmatprep.subr.bf16.mxu0 %v1865
    %2477 = vmatpush1.bf16.msra.mxu0 %v1864
    %2478 = vmatprep.subr.bf16.mxu0 %v1861
    %2479 = vmatpush1.bf16.msra.mxu0 %v1860
    %2480 = vmatprep.subr.bf16.mxu0 %v1857
    %2481 = vmatpush1.bf16.msra.mxu0 %v1856
    %2482 = vmatprep.subr.bf16.mxu0 %v1853
    %2483 = vmatpush1.bf16.msra.mxu0 %v1852
    %2484 = vmatprep.subr.bf16.mxu0 %v1849
    %2485 = vmatpush1.bf16.msra.mxu0 %v1848
    %2486 = vmatprep.subr.bf16.mxu0 %v1845
    %2487 = vmatpush1.bf16.msra.mxu0 %v1844
    %2488 = vmatprep.subr.bf16.mxu0 %v1905
    %2489 = vmatpush2.bf16.msra.mxu0 %v1904
    %2490 = vmatprep.subr.bf16.mxu0 %v1901
    %2491 = vmatpush2.bf16.msra.mxu0 %v1900
    %2492 = vmatprep.subr.bf16.mxu0 %v1897
    %2493 = vmatpush2.bf16.msra.mxu0 %v1896
    %2494 = vmatprep.subr.bf16.mxu0 %v1893
    %2495 = vmatpush2.bf16.msra.mxu0 %v1892
    %2496 = vmatprep.subr.bf16.mxu0 %v1889
    %2497 = vmatpush2.bf16.msra.mxu0 %v1888
    %2498 = vmatprep.subr.bf16.mxu0 %v1885
    %2499 = vmatpush2.bf16.msra.mxu0 %v1884
    %2500 = vmatprep.subr.bf16.mxu0 %v1881
    %2501 = vmatpush2.bf16.msra.mxu0 %v1880
    %2502 = vmatprep.subr.bf16.mxu0 %v1877
    %2503 = vmatpush2.bf16.msra.mxu0 %v1876
    %2504 = vmatprep.mubr.bf16.mxu0 %v665
    %2505 = vmatmul.mubr.bf16.gmra.mxu0 %v664
    %v2506 = vpop.f32.mrf.mxu0
    %v2507 = vadd.f32 %v2466, %v2506
    %v2508 = vpop.f32.mrf.mxu0
    %v2509 = vadd.f32 %v2468, %v2508
    %v2510 = vpop.f32.mrf.mxu0
    %v2511 = vpop.f32.mrf.mxu0
    %2512 = vdwg.mxu0
    %2513 = vmatprep.subr.bf16.mxu0 %v1937
    %2514 = vmatpush1.bf16.msra.mxu0 %v1936
    %2515 = vmatprep.subr.bf16.mxu0 %v1933
    %2516 = vmatpush1.bf16.msra.mxu0 %v1932
    %2517 = vmatprep.subr.bf16.mxu0 %v1929
    %2518 = vmatpush1.bf16.msra.mxu0 %v1928
    %2519 = vmatprep.subr.bf16.mxu0 %v1925
    %2520 = vmatpush1.bf16.msra.mxu0 %v1924
    %2521 = vmatprep.subr.bf16.mxu0 %v1921
    %2522 = vmatpush1.bf16.msra.mxu0 %v1920
    %2523 = vmatprep.subr.bf16.mxu0 %v1917
    %2524 = vmatpush1.bf16.msra.mxu0 %v1916
    %2525 = vmatprep.subr.bf16.mxu0 %v1913
    %2526 = vmatpush1.bf16.msra.mxu0 %v1912
    %2527 = vmatprep.subr.bf16.mxu0 %v1909
    %2528 = vmatpush1.bf16.msra.mxu0 %v1908
    %2529 = vmatprep.subr.bf16.mxu0 %v1969
    %2530 = vmatpush2.bf16.msra.mxu0 %v1968
    %2531 = vmatprep.subr.bf16.mxu0 %v1965
    %2532 = vmatpush2.bf16.msra.mxu0 %v1964
    %2533 = vmatprep.subr.bf16.mxu0 %v1961
    %2534 = vmatpush2.bf16.msra.mxu0 %v1960
    %2535 = vmatprep.subr.bf16.mxu0 %v1957
    %2536 = vmatpush2.bf16.msra.mxu0 %v1956
    %2537 = vmatprep.subr.bf16.mxu0 %v1953
    %2538 = vmatpush2.bf16.msra.mxu0 %v1952
    %2539 = vmatprep.subr.bf16.mxu0 %v1949
    %2540 = vmatpush2.bf16.msra.mxu0 %v1948
    %2541 = vmatprep.subr.bf16.mxu0 %v1945
    %2542 = vmatpush2.bf16.msra.mxu0 %v1944
    %2543 = vmatprep.subr.bf16.mxu0 %v1941
    %2544 = vmatpush2.bf16.msra.mxu0 %v1940
    %2545 = vmatprep.mubr.bf16.mxu0 %v667
    %2546 = vmatmul.mubr.bf16.gmra.mxu0 %v666
    %v2547 = vpop.f32.mrf.mxu0
    %v2548 = vadd.f32 %v2507, %v2547
    %v2549 = vpop.f32.mrf.mxu0
    %v2550 = vadd.f32 %v2509, %v2549
    %v2551 = vpop.f32.mrf.mxu0
    %v2552 = vpop.f32.mrf.mxu0
    %2553 = vdwg.mxu0
    %v2554 = vmax.f32 %v2384, 0.0
    %v2555 = vmax.f32 %v2386, 0.0
    %v2556 = vmax.f32 %v2548, 0.0
    %v2557 = vmax.f32 %v2550, 0.0
    %v2558 = vpack.c.bf16 %v2554, %v2554
    %v2559 = vpack.c.bf16 %v2555, %v2555
    %v2560 = vpack.c.bf16 %v2556, %v2556
    %v2561 = vpack.c.bf16 %v2557, %v2557
    %v2562 = vld [vmem:[#allocation5 + $0xa00] sm:$0xff]
    %v2563 = vld [vmem:[#allocation5 + $0xa10] sm:$0xff]
    %v2564 = vld [vmem:[#allocation5 + $0xa20] sm:$0xff]
    %v2565 = vld [vmem:[#allocation5 + $0xa30] sm:$0xff]
    %v2566 = vld [vmem:[#allocation5 + $0xa40] sm:$0xff]
    %v2567 = vld [vmem:[#allocation5 + $0xa50] sm:$0xff]
    %v2568 = vld [vmem:[#allocation5 + $0xa60] sm:$0xff]
    %v2569 = vld [vmem:[#allocation5 + $0xa70] sm:$0xff]
    %v2570 = vld [vmem:[#allocation5 + $0xa80] sm:$0xff]
    %v2571 = vld [vmem:[#allocation5 + $0xa90] sm:$0xff]
    %v2572 = vld [vmem:[#allocation5 + $0xaa0] sm:$0xff]
    %v2573 = vld [vmem:[#allocation5 + $0xab0] sm:$0xff]
    %v2574 = vld [vmem:[#allocation5 + $0xac0] sm:$0xff]
    %v2575 = vld [vmem:[#allocation5 + $0xad0] sm:$0xff]
    %v2576 = vld [vmem:[#allocation5 + $0xae0] sm:$0xff]
    %v2577 = vld [vmem:[#allocation5 + $0xaf0] sm:$0xff]
    %v2578 = vld [vmem:[#allocation5 + $0xb00] sm:$0xff]
    %v2579 = vld [vmem:[#allocation5 + $0xb10] sm:$0xff]
    %v2580 = vld [vmem:[#allocation5 + $0xb20] sm:$0xff]
    %v2581 = vld [vmem:[#allocation5 + $0xb30] sm:$0xff]
    %v2582 = vld [vmem:[#allocation5 + $0xb40] sm:$0xff]
    %v2583 = vld [vmem:[#allocation5 + $0xb50] sm:$0xff]
    %v2584 = vld [vmem:[#allocation5 + $0xb60] sm:$0xff]
    %v2585 = vld [vmem:[#allocation5 + $0xb70] sm:$0xff]
    %v2586 = vld [vmem:[#allocation5 + $0xb80] sm:$0xff]
    %v2587 = vld [vmem:[#allocation5 + $0xb90] sm:$0xff]
    %v2588 = vld [vmem:[#allocation5 + $0xba0] sm:$0xff]
    %v2589 = vld [vmem:[#allocation5 + $0xbb0] sm:$0xff]
    %v2590 = vld [vmem:[#allocation5 + $0xbc0] sm:$0xff]
    %v2591 = vld [vmem:[#allocation5 + $0xbd0] sm:$0xff]
    %v2592 = vld [vmem:[#allocation5 + $0xbe0] sm:$0xff]
    %v2593 = vld [vmem:[#allocation5 + $0xbf0] sm:$0xff]
    %v2594 = vld [vmem:[#allocation5 + $0xa08] sm:$0xff]
    %v2595 = vld [vmem:[#allocation5 + $0xa18] sm:$0xff]
    %v2596 = vld [vmem:[#allocation5 + $0xa28] sm:$0xff]
    %v2597 = vld [vmem:[#allocation5 + $0xa38] sm:$0xff]
    %v2598 = vld [vmem:[#allocation5 + $0xa48] sm:$0xff]
    %v2599 = vld [vmem:[#allocation5 + $0xa58] sm:$0xff]
    %v2600 = vld [vmem:[#allocation5 + $0xa68] sm:$0xff]
    %v2601 = vld [vmem:[#allocation5 + $0xa78] sm:$0xff]
    %v2602 = vld [vmem:[#allocation5 + $0xa88] sm:$0xff]
    %v2603 = vld [vmem:[#allocation5 + $0xa98] sm:$0xff]
    %v2604 = vld [vmem:[#allocation5 + $0xaa8] sm:$0xff]
    %v2605 = vld [vmem:[#allocation5 + $0xab8] sm:$0xff]
    %v2606 = vld [vmem:[#allocation5 + $0xac8] sm:$0xff]
    %v2607 = vld [vmem:[#allocation5 + $0xad8] sm:$0xff]
    %v2608 = vld [vmem:[#allocation5 + $0xae8] sm:$0xff]
    %v2609 = vld [vmem:[#allocation5 + $0xaf8] sm:$0xff]
    %v2610 = vld [vmem:[#allocation5 + $0xb08] sm:$0xff]
    %v2611 = vld [vmem:[#allocation5 + $0xb18] sm:$0xff]
    %v2612 = vld [vmem:[#allocation5 + $0xb28] sm:$0xff]
    %v2613 = vld [vmem:[#allocation5 + $0xb38] sm:$0xff]
    %v2614 = vld [vmem:[#allocation5 + $0xb48] sm:$0xff]
    %v2615 = vld [vmem:[#allocation5 + $0xb58] sm:$0xff]
    %v2616 = vld [vmem:[#allocation5 + $0xb68] sm:$0xff]
    %v2617 = vld [vmem:[#allocation5 + $0xb78] sm:$0xff]
    %v2618 = vld [vmem:[#allocation5 + $0xb88] sm:$0xff]
    %v2619 = vld [vmem:[#allocation5 + $0xb98] sm:$0xff]
    %v2620 = vld [vmem:[#allocation5 + $0xba8] sm:$0xff]
    %v2621 = vld [vmem:[#allocation5 + $0xbb8] sm:$0xff]
    %v2622 = vld [vmem:[#allocation5 + $0xbc8] sm:$0xff]
    %v2623 = vld [vmem:[#allocation5 + $0xbd8] sm:$0xff]
    %v2624 = vld [vmem:[#allocation5 + $0xbe8] sm:$0xff]
    %v2625 = vld [vmem:[#allocation5 + $0xbf8] sm:$0xff]
    %v2658 = vunpack.c.l.b16 %v2594
    %v2659 = vunpack.c.h.b16 %v2594
    %v2660 = vunpack.c.l.b16 %v2595
    %v2661 = vunpack.c.h.b16 %v2595
    %v2662 = vunpack.c.l.b16 %v2596
    %v2663 = vunpack.c.h.b16 %v2596
    %v2664 = vunpack.c.l.b16 %v2597
    %v2665 = vunpack.c.h.b16 %v2597
    %v2666 = vunpack.c.l.b16 %v2598
    %v2667 = vunpack.c.h.b16 %v2598
    %v2668 = vunpack.c.l.b16 %v2599
    %v2669 = vunpack.c.h.b16 %v2599
    %v2670 = vunpack.c.l.b16 %v2600
    %v2671 = vunpack.c.h.b16 %v2600
    %v2672 = vunpack.c.l.b16 %v2601
    %v2673 = vunpack.c.h.b16 %v2601
    %v2674 = vunpack.c.l.b16 %v2602
    %v2675 = vunpack.c.h.b16 %v2602
    %v2676 = vunpack.c.l.b16 %v2603
    %v2677 = vunpack.c.h.b16 %v2603
    %v2678 = vunpack.c.l.b16 %v2604
    %v2679 = vunpack.c.h.b16 %v2604
    %v2680 = vunpack.c.l.b16 %v2605
    %v2681 = vunpack.c.h.b16 %v2605
    %v2682 = vunpack.c.l.b16 %v2606
    %v2683 = vunpack.c.h.b16 %v2606
    %v2684 = vunpack.c.l.b16 %v2607
    %v2685 = vunpack.c.h.b16 %v2607
    %v2686 = vunpack.c.l.b16 %v2608
    %v2687 = vunpack.c.h.b16 %v2608
    %v2688 = vunpack.c.l.b16 %v2609
    %v2689 = vunpack.c.h.b16 %v2609
    %v2690 = vunpack.c.l.b16 %v2610
    %v2691 = vunpack.c.h.b16 %v2610
    %v2692 = vunpack.c.l.b16 %v2611
    %v2693 = vunpack.c.h.b16 %v2611
    %v2694 = vunpack.c.l.b16 %v2612
    %v2695 = vunpack.c.h.b16 %v2612
    %v2696 = vunpack.c.l.b16 %v2613
    %v2697 = vunpack.c.h.b16 %v2613
    %v2698 = vunpack.c.l.b16 %v2614
    %v2699 = vunpack.c.h.b16 %v2614
    %v2700 = vunpack.c.l.b16 %v2615
    %v2701 = vunpack.c.h.b16 %v2615
    %v2702 = vunpack.c.l.b16 %v2616
    %v2703 = vunpack.c.h.b16 %v2616
    %v2704 = vunpack.c.l.b16 %v2617
    %v2705 = vunpack.c.h.b16 %v2617
    %v2706 = vunpack.c.l.b16 %v2618
    %v2707 = vunpack.c.h.b16 %v2618
    %v2708 = vunpack.c.l.b16 %v2619
    %v2709 = vunpack.c.h.b16 %v2619
    %v2710 = vunpack.c.l.b16 %v2620
    %v2711 = vunpack.c.h.b16 %v2620
    %v2712 = vunpack.c.l.b16 %v2621
    %v2713 = vunpack.c.h.b16 %v2621
    %v2714 = vunpack.c.l.b16 %v2622
    %v2715 = vunpack.c.h.b16 %v2622
    %v2716 = vunpack.c.l.b16 %v2623
    %v2717 = vunpack.c.h.b16 %v2623
    %v2718 = vunpack.c.l.b16 %v2624
    %v2719 = vunpack.c.h.b16 %v2624
    %v2720 = vunpack.c.l.b16 %v2625
    %v2721 = vunpack.c.h.b16 %v2625
    %v2722 = vpack.c.b16 %v2660, %v2658
    %v2723 = vpack.c.b16 %v2661, %v2659
    %v2724 = vpack.c.b16 %v2664, %v2662
    %v2725 = vpack.c.b16 %v2665, %v2663
    %v2726 = vpack.c.b16 %v2668, %v2666
    %v2727 = vpack.c.b16 %v2669, %v2667
    %v2728 = vpack.c.b16 %v2672, %v2670
    %v2729 = vpack.c.b16 %v2673, %v2671
    %v2730 = vpack.c.b16 %v2676, %v2674
    %v2731 = vpack.c.b16 %v2677, %v2675
    %v2732 = vpack.c.b16 %v2680, %v2678
    %v2733 = vpack.c.b16 %v2681, %v2679
    %v2734 = vpack.c.b16 %v2684, %v2682
    %v2735 = vpack.c.b16 %v2685, %v2683
    %v2736 = vpack.c.b16 %v2688, %v2686
    %v2737 = vpack.c.b16 %v2689, %v2687
    %v2738 = vpack.c.b16 %v2692, %v2690
    %v2739 = vpack.c.b16 %v2693, %v2691
    %v2740 = vpack.c.b16 %v2696, %v2694
    %v2741 = vpack.c.b16 %v2697, %v2695
    %v2742 = vpack.c.b16 %v2700, %v2698
    %v2743 = vpack.c.b16 %v2701, %v2699
    %v2744 = vpack.c.b16 %v2704, %v2702
    %v2745 = vpack.c.b16 %v2705, %v2703
    %v2746 = vpack.c.b16 %v2708, %v2706
    %v2747 = vpack.c.b16 %v2709, %v2707
    %v2748 = vpack.c.b16 %v2712, %v2710
    %v2749 = vpack.c.b16 %v2713, %v2711
    %v2750 = vpack.c.b16 %v2716, %v2714
    %v2751 = vpack.c.b16 %v2717, %v2715
    %v2752 = vpack.c.b16 %v2720, %v2718
    %v2753 = vpack.c.b16 %v2721, %v2719
    %2786 = vmatprep.subr.bf16.mxu0 %v2737
    %2787 = vmatpush1.bf16.msra.mxu0 %v2736
    %2788 = vmatprep.subr.bf16.mxu0 %v2735
    %2789 = vmatpush1.bf16.msra.mxu0 %v2734
    %2790 = vmatprep.subr.bf16.mxu0 %v2733
    %2791 = vmatpush1.bf16.msra.mxu0 %v2732
    %2792 = vmatprep.subr.bf16.mxu0 %v2731
    %2793 = vmatpush1.bf16.msra.mxu0 %v2730
    %2794 = vmatprep.subr.bf16.mxu0 %v2729
    %2795 = vmatpush1.bf16.msra.mxu0 %v2728
    %2796 = vmatprep.subr.bf16.mxu0 %v2727
    %2797 = vmatpush1.bf16.msra.mxu0 %v2726
    %2798 = vmatprep.subr.bf16.mxu0 %v2725
    %2799 = vmatpush1.bf16.msra.mxu0 %v2724
    %2800 = vmatprep.subr.bf16.mxu0 %v2723
    %2801 = vmatpush1.bf16.msra.mxu0 %v2722
    %2802 = vmatprep.subr.bf16.mxu0 %v2753
    %2803 = vmatpush2.bf16.msra.mxu0 %v2752
    %2804 = vmatprep.subr.bf16.mxu0 %v2751
    %2805 = vmatpush2.bf16.msra.mxu0 %v2750
    %2806 = vmatprep.subr.bf16.mxu0 %v2749
    %2807 = vmatpush2.bf16.msra.mxu0 %v2748
    %2808 = vmatprep.subr.bf16.mxu0 %v2747
    %2809 = vmatpush2.bf16.msra.mxu0 %v2746
    %2810 = vmatprep.subr.bf16.mxu0 %v2745
    %2811 = vmatpush2.bf16.msra.mxu0 %v2744
    %2812 = vmatprep.subr.bf16.mxu0 %v2743
    %2813 = vmatpush2.bf16.msra.mxu0 %v2742
    %2814 = vmatprep.subr.bf16.mxu0 %v2741
    %2815 = vmatpush2.bf16.msra.mxu0 %v2740
    %2816 = vmatprep.subr.bf16.mxu0 %v2739
    %2817 = vmatpush2.bf16.msra.mxu0 %v2738
    %2818 = vmatprep.mubr.bf16.mxu0 %v2561
    %2819 = vmatmul.mubr.bf16.gmra.mxu0 %v2560
    %v2820 = vpop.f32.mrf.mxu0
    %v2821 = vadd.f32 0.0, %v2820
    %v2822 = vpop.f32.mrf.mxu0
    %v2823 = vadd.f32 0.0, %v2822
    %v2824 = vpop.f32.mrf.mxu0
    %v2825 = vpop.f32.mrf.mxu0
    %2826 = vdwg.mxu0
    %v2859 = vunpack.c.l.b16 %v2562
    %v2860 = vunpack.c.h.b16 %v2562
    %v2861 = vunpack.c.l.b16 %v2563
    %v2862 = vunpack.c.h.b16 %v2563
    %v2863 = vunpack.c.l.b16 %v2564
    %v2864 = vunpack.c.h.b16 %v2564
    %v2865 = vunpack.c.l.b16 %v2565
    %v2866 = vunpack.c.h.b16 %v2565
    %v2867 = vunpack.c.l.b16 %v2566
    %v2868 = vunpack.c.h.b16 %v2566
    %v2869 = vunpack.c.l.b16 %v2567
    %v2870 = vunpack.c.h.b16 %v2567
    %v2871 = vunpack.c.l.b16 %v2568
    %v2872 = vunpack.c.h.b16 %v2568
    %v2873 = vunpack.c.l.b16 %v2569
    %v2874 = vunpack.c.h.b16 %v2569
    %v2875 = vunpack.c.l.b16 %v2570
    %v2876 = vunpack.c.h.b16 %v2570
    %v2877 = vunpack.c.l.b16 %v2571
    %v2878 = vunpack.c.h.b16 %v2571
    %v2879 = vunpack.c.l.b16 %v2572
    %v2880 = vunpack.c.h.b16 %v2572
    %v2881 = vunpack.c.l.b16 %v2573
    %v2882 = vunpack.c.h.b16 %v2573
    %v2883 = vunpack.c.l.b16 %v2574
    %v2884 = vunpack.c.h.b16 %v2574
    %v2885 = vunpack.c.l.b16 %v2575
    %v2886 = vunpack.c.h.b16 %v2575
    %v2887 = vunpack.c.l.b16 %v2576
    %v2888 = vunpack.c.h.b16 %v2576
    %v2889 = vunpack.c.l.b16 %v2577
    %v2890 = vunpack.c.h.b16 %v2577
    %v2891 = vunpack.c.l.b16 %v2578
    %v2892 = vunpack.c.h.b16 %v2578
    %v2893 = vunpack.c.l.b16 %v2579
    %v2894 = vunpack.c.h.b16 %v2579
    %v2895 = vunpack.c.l.b16 %v2580
    %v2896 = vunpack.c.h.b16 %v2580
    %v2897 = vunpack.c.l.b16 %v2581
    %v2898 = vunpack.c.h.b16 %v2581
    %v2899 = vunpack.c.l.b16 %v2582
    %v2900 = vunpack.c.h.b16 %v2582
    %v2901 = vunpack.c.l.b16 %v2583
    %v2902 = vunpack.c.h.b16 %v2583
    %v2903 = vunpack.c.l.b16 %v2584
    %v2904 = vunpack.c.h.b16 %v2584
    %v2905 = vunpack.c.l.b16 %v2585
    %v2906 = vunpack.c.h.b16 %v2585
    %v2907 = vunpack.c.l.b16 %v2586
    %v2908 = vunpack.c.h.b16 %v2586
    %v2909 = vunpack.c.l.b16 %v2587
    %v2910 = vunpack.c.h.b16 %v2587
    %v2911 = vunpack.c.l.b16 %v2588
    %v2912 = vunpack.c.h.b16 %v2588
    %v2913 = vunpack.c.l.b16 %v2589
    %v2914 = vunpack.c.h.b16 %v2589
    %v2915 = vunpack.c.l.b16 %v2590
    %v2916 = vunpack.c.h.b16 %v2590
    %v2917 = vunpack.c.l.b16 %v2591
    %v2918 = vunpack.c.h.b16 %v2591
    %v2919 = vunpack.c.l.b16 %v2592
    %v2920 = vunpack.c.h.b16 %v2592
    %v2921 = vunpack.c.l.b16 %v2593
    %v2922 = vunpack.c.h.b16 %v2593
    %v2923 = vpack.c.b16 %v2861, %v2859
    %v2924 = vpack.c.b16 %v2862, %v2860
    %v2925 = vpack.c.b16 %v2865, %v2863
    %v2926 = vpack.c.b16 %v2866, %v2864
    %v2927 = vpack.c.b16 %v2869, %v2867
    %v2928 = vpack.c.b16 %v2870, %v2868
    %v2929 = vpack.c.b16 %v2873, %v2871
    %v2930 = vpack.c.b16 %v2874, %v2872
    %v2931 = vpack.c.b16 %v2877, %v2875
    %v2932 = vpack.c.b16 %v2878, %v2876
    %v2933 = vpack.c.b16 %v2881, %v2879
    %v2934 = vpack.c.b16 %v2882, %v2880
    %v2935 = vpack.c.b16 %v2885, %v2883
    %v2936 = vpack.c.b16 %v2886, %v2884
    %v2937 = vpack.c.b16 %v2889, %v2887
    %v2938 = vpack.c.b16 %v2890, %v2888
    %v2939 = vpack.c.b16 %v2893, %v2891
    %v2940 = vpack.c.b16 %v2894, %v2892
    %v2941 = vpack.c.b16 %v2897, %v2895
    %v2942 = vpack.c.b16 %v2898, %v2896
    %v2943 = vpack.c.b16 %v2901, %v2899
    %v2944 = vpack.c.b16 %v2902, %v2900
    %v2945 = vpack.c.b16 %v2905, %v2903
    %v2946 = vpack.c.b16 %v2906, %v2904
    %v2947 = vpack.c.b16 %v2909, %v2907
    %v2948 = vpack.c.b16 %v2910, %v2908
    %v2949 = vpack.c.b16 %v2913, %v2911
    %v2950 = vpack.c.b16 %v2914, %v2912
    %v2951 = vpack.c.b16 %v2917, %v2915
    %v2952 = vpack.c.b16 %v2918, %v2916
    %v2953 = vpack.c.b16 %v2921, %v2919
    %v2954 = vpack.c.b16 %v2922, %v2920
    %2987 = vmatprep.subr.bf16.mxu0 %v2938
    %2988 = vmatpush1.bf16.msra.mxu0 %v2937
    %2989 = vmatprep.subr.bf16.mxu0 %v2936
    %2990 = vmatpush1.bf16.msra.mxu0 %v2935
    %2991 = vmatprep.subr.bf16.mxu0 %v2934
    %2992 = vmatpush1.bf16.msra.mxu0 %v2933
    %2993 = vmatprep.subr.bf16.mxu0 %v2932
    %2994 = vmatpush1.bf16.msra.mxu0 %v2931
    %2995 = vmatprep.subr.bf16.mxu0 %v2930
    %2996 = vmatpush1.bf16.msra.mxu0 %v2929
    %2997 = vmatprep.subr.bf16.mxu0 %v2928
    %2998 = vmatpush1.bf16.msra.mxu0 %v2927
    %2999 = vmatprep.subr.bf16.mxu0 %v2926
    %3000 = vmatpush1.bf16.msra.mxu0 %v2925
    %3001 = vmatprep.subr.bf16.mxu0 %v2924
    %3002 = vmatpush1.bf16.msra.mxu0 %v2923
    %3003 = vmatprep.subr.bf16.mxu0 %v2954
    %3004 = vmatpush2.bf16.msra.mxu0 %v2953
    %3005 = vmatprep.subr.bf16.mxu0 %v2952
    %3006 = vmatpush2.bf16.msra.mxu0 %v2951
    %3007 = vmatprep.subr.bf16.mxu0 %v2950
    %3008 = vmatpush2.bf16.msra.mxu0 %v2949
    %3009 = vmatprep.subr.bf16.mxu0 %v2948
    %3010 = vmatpush2.bf16.msra.mxu0 %v2947
    %3011 = vmatprep.subr.bf16.mxu0 %v2946
    %3012 = vmatpush2.bf16.msra.mxu0 %v2945
    %3013 = vmatprep.subr.bf16.mxu0 %v2944
    %3014 = vmatpush2.bf16.msra.mxu0 %v2943
    %3015 = vmatprep.subr.bf16.mxu0 %v2942
    %3016 = vmatpush2.bf16.msra.mxu0 %v2941
    %3017 = vmatprep.subr.bf16.mxu0 %v2940
    %3018 = vmatpush2.bf16.msra.mxu0 %v2939
    %3019 = vmatprep.mubr.bf16.mxu0 %v2559
    %3020 = vmatmul.mubr.bf16.gmra.mxu0 %v2558
    %v3021 = vpop.f32.mrf.mxu0
    %v3022 = vadd.f32 %v2821, %v3021
    %v3023 = vpop.f32.mrf.mxu0
    %v3024 = vadd.f32 %v2823, %v3023
    %v3025 = vpop.f32.mrf.mxu0
    %v3026 = vpop.f32.mrf.mxu0
    %3027 = vdwg.mxu0
    %v3028 = vld [vmem:[#allocation7 + $0xc] sm:$0x3]
    %v3030 = vlaneseq
    %v3031 = vshrl.u32 %v3030, 7
    %v3032 = vsub.s32 0, %v3031
    %v3033 = vrot.slane %v3028, %v3032
    %v3034 = vlaneseq
    %v3035 = vshrl.u32 %v3034, 7
    %v3036 = vsub.s32 1, %v3035
    %v3037 = vrot.slane %v3028, %v3036
    %v3040 = vadd.f32 %v3022, %v3033
    %v3041 = vadd.f32 %v3024, %v3037
    %v3042 = vmax.f32 %v3040, 0.0
    %v3043 = vmax.f32 %v3041, 0.0
    %v3044 = vpack.c.bf16 %v3042, %v3042
    %v3045 = vpack.c.bf16 %v3043, %v3043
    %v3046 = vld [vmem:[#allocation5 + $0xc00] sm:$0xf]
    %v3047 = vld [vmem:[#allocation5 + $0xc10] sm:$0xf]
    %v3048 = vld [vmem:[#allocation5 + $0xc20] sm:$0xf]
    %v3049 = vld [vmem:[#allocation5 + $0xc30] sm:$0xf]
    %v3050 = vld [vmem:[#allocation5 + $0xc40] sm:$0xf]
    %v3051 = vld [vmem:[#allocation5 + $0xc50] sm:$0xf]
    %v3052 = vld [vmem:[#allocation5 + $0xc60] sm:$0xf]
    %v3053 = vld [vmem:[#allocation5 + $0xc70] sm:$0xf]
    %v3054 = vld [vmem:[#allocation5 + $0xc80] sm:$0xf]
    %v3055 = vld [vmem:[#allocation5 + $0xc90] sm:$0xf]
    %v3056 = vld [vmem:[#allocation5 + $0xca0] sm:$0xf]
    %v3057 = vld [vmem:[#allocation5 + $0xcb0] sm:$0xf]
    %v3058 = vld [vmem:[#allocation5 + $0xcc0] sm:$0xf]
    %v3059 = vld [vmem:[#allocation5 + $0xcd0] sm:$0xf]
    %v3060 = vld [vmem:[#allocation5 + $0xce0] sm:$0xf]
    %v3061 = vld [vmem:[#allocation5 + $0xcf0] sm:$0xf]
    %v3062 = vld [vmem:[#allocation5 + $0xc04] sm:$0xf]
    %v3063 = vld [vmem:[#allocation5 + $0xc14] sm:$0xf]
    %v3064 = vld [vmem:[#allocation5 + $0xc24] sm:$0xf]
    %v3065 = vld [vmem:[#allocation5 + $0xc34] sm:$0xf]
    %v3066 = vld [vmem:[#allocation5 + $0xc44] sm:$0xf]
    %v3067 = vld [vmem:[#allocation5 + $0xc54] sm:$0xf]
    %v3068 = vld [vmem:[#allocation5 + $0xc64] sm:$0xf]
    %v3069 = vld [vmem:[#allocation5 + $0xc74] sm:$0xf]
    %v3070 = vld [vmem:[#allocation5 + $0xc84] sm:$0xf]
    %v3071 = vld [vmem:[#allocation5 + $0xc94] sm:$0xf]
    %v3072 = vld [vmem:[#allocation5 + $0xca4] sm:$0xf]
    %v3073 = vld [vmem:[#allocation5 + $0xcb4] sm:$0xf]
    %v3074 = vld [vmem:[#allocation5 + $0xcc4] sm:$0xf]
    %v3075 = vld [vmem:[#allocation5 + $0xcd4] sm:$0xf]
    %v3076 = vld [vmem:[#allocation5 + $0xce4] sm:$0xf]
    %v3077 = vld [vmem:[#allocation5 + $0xcf4] sm:$0xf]
    %v3094 = vunpack.c.l.b16 %v3062
    %v3095 = vunpack.c.l.b16 %v3063
    %v3096 = vunpack.c.l.b16 %v3064
    %v3097 = vunpack.c.l.b16 %v3065
    %v3098 = vunpack.c.l.b16 %v3066
    %v3099 = vunpack.c.l.b16 %v3067
    %v3100 = vunpack.c.l.b16 %v3068
    %v3101 = vunpack.c.l.b16 %v3069
    %v3102 = vunpack.c.l.b16 %v3070
    %v3103 = vunpack.c.l.b16 %v3071
    %v3104 = vunpack.c.l.b16 %v3072
    %v3105 = vunpack.c.l.b16 %v3073
    %v3106 = vunpack.c.l.b16 %v3074
    %v3107 = vunpack.c.l.b16 %v3075
    %v3108 = vunpack.c.l.b16 %v3076
    %v3109 = vunpack.c.l.b16 %v3077
    %v3110 = vpack.c.b16 %v3095, %v3094
    %v3111 = vpack.c.b16 %v3097, %v3096
    %v3112 = vpack.c.b16 %v3099, %v3098
    %v3113 = vpack.c.b16 %v3101, %v3100
    %v3114 = vpack.c.b16 %v3103, %v3102
    %v3115 = vpack.c.b16 %v3105, %v3104
    %v3116 = vpack.c.b16 %v3107, %v3106
    %v3117 = vpack.c.b16 %v3109, %v3108
    %3126 = vmatprep.subr.bf16.mxu0 0
    %3127 = vmatpush1.bf16.msra.mxu0 %v3117
    %3128 = vmatprep.subr.bf16.mxu0 0
    %3129 = vmatpush1.bf16.msra.mxu0 %v3116
    %3130 = vmatprep.subr.bf16.mxu0 0
    %3131 = vmatpush1.bf16.msra.mxu0 %v3115
    %3132 = vmatprep.subr.bf16.mxu0 0
    %3133 = vmatpush1.bf16.msra.mxu0 %v3114
    %3134 = vmatprep.subr.bf16.mxu0 0
    %3135 = vmatpush1.bf16.msra.mxu0 %v3113
    %3136 = vmatprep.subr.bf16.mxu0 0
    %3137 = vmatpush1.bf16.msra.mxu0 %v3112
    %3138 = vmatprep.subr.bf16.mxu0 0
    %3139 = vmatpush1.bf16.msra.mxu0 %v3111
    %3140 = vmatprep.subr.bf16.mxu0 0
    %3141 = vmatpush1.bf16.msra.mxu0 %v3110
    %3142 = vmatprep.subr.bf16.mxu0 0
    %3143 = vmatpush2.bf16.msra.mxu0 0
    %3144 = vmatprep.subr.bf16.mxu0 0
    %3145 = vmatpush2.bf16.msra.mxu0 0
    %3146 = vmatprep.subr.bf16.mxu0 0
    %3147 = vmatpush2.bf16.msra.mxu0 0
    %3148 = vmatprep.subr.bf16.mxu0 0
    %3149 = vmatpush2.bf16.msra.mxu0 0
    %3150 = vmatprep.subr.bf16.mxu0 0
    %3151 = vmatpush2.bf16.msra.mxu0 0
    %3152 = vmatprep.subr.bf16.mxu0 0
    %3153 = vmatpush2.bf16.msra.mxu0 0
    %3154 = vmatprep.subr.bf16.mxu0 0
    %3155 = vmatpush2.bf16.msra.mxu0 0
    %3156 = vmatprep.subr.bf16.mxu0 0
    %3157 = vmatpush2.bf16.msra.mxu0 0
    %3158 = vmatprep.mubr.bf16.mxu0 0
    %3159 = vmatmul.mubr.bf16.gmra.mxu0 %v3045
    %v3160 = vpop.f32.mrf.mxu0
    %v3161 = vadd.f32 0.0, %v3160
    %v3162 = vpop.f32.mrf.mxu0
    %v3163 = vpop.f32.mrf.mxu0
    %v3164 = vpop.f32.mrf.mxu0
    %3165 = vdwg.mxu0
    %v3182 = vunpack.c.l.b16 %v3046
    %v3183 = vunpack.c.l.b16 %v3047
    %v3184 = vunpack.c.l.b16 %v3048
    %v3185 = vunpack.c.l.b16 %v3049
    %v3186 = vunpack.c.l.b16 %v3050
    %v3187 = vunpack.c.l.b16 %v3051
    %v3188 = vunpack.c.l.b16 %v3052
    %v3189 = vunpack.c.l.b16 %v3053
    %v3190 = vunpack.c.l.b16 %v3054
    %v3191 = vunpack.c.l.b16 %v3055
    %v3192 = vunpack.c.l.b16 %v3056
    %v3193 = vunpack.c.l.b16 %v3057
    %v3194 = vunpack.c.l.b16 %v3058
    %v3195 = vunpack.c.l.b16 %v3059
    %v3196 = vunpack.c.l.b16 %v3060
    %v3197 = vunpack.c.l.b16 %v3061
    %v3198 = vpack.c.b16 %v3183, %v3182
    %v3199 = vpack.c.b16 %v3185, %v3184
    %v3200 = vpack.c.b16 %v3187, %v3186
    %v3201 = vpack.c.b16 %v3189, %v3188
    %v3202 = vpack.c.b16 %v3191, %v3190
    %v3203 = vpack.c.b16 %v3193, %v3192
    %v3204 = vpack.c.b16 %v3195, %v3194
    %v3205 = vpack.c.b16 %v3197, %v3196
    %3214 = vmatprep.subr.bf16.mxu0 0
    %3215 = vmatpush1.bf16.msra.mxu0 %v3205
    %3216 = vmatprep.subr.bf16.mxu0 0
    %3217 = vmatpush1.bf16.msra.mxu0 %v3204
    %3218 = vmatprep.subr.bf16.mxu0 0
    %3219 = vmatpush1.bf16.msra.mxu0 %v3203
    %3220 = vmatprep.subr.bf16.mxu0 0
    %3221 = vmatpush1.bf16.msra.mxu0 %v3202
    %3222 = vmatprep.subr.bf16.mxu0 0
    %3223 = vmatpush1.bf16.msra.mxu0 %v3201
    %3224 = vmatprep.subr.bf16.mxu0 0
    %3225 = vmatpush1.bf16.msra.mxu0 %v3200
    %3226 = vmatprep.subr.bf16.mxu0 0
    %3227 = vmatpush1.bf16.msra.mxu0 %v3199
    %3228 = vmatprep.subr.bf16.mxu0 0
    %3229 = vmatpush1.bf16.msra.mxu0 %v3198
    %3230 = vmatprep.subr.bf16.mxu0 0
    %3231 = vmatpush2.bf16.msra.mxu0 0
    %3232 = vmatprep.subr.bf16.mxu0 0
    %3233 = vmatpush2.bf16.msra.mxu0 0
    %3234 = vmatprep.subr.bf16.mxu0 0
    %3235 = vmatpush2.bf16.msra.mxu0 0
    %3236 = vmatprep.subr.bf16.mxu0 0
    %3237 = vmatpush2.bf16.msra.mxu0 0
    %3238 = vmatprep.subr.bf16.mxu0 0
    %3239 = vmatpush2.bf16.msra.mxu0 0
    %3240 = vmatprep.subr.bf16.mxu0 0
    %3241 = vmatpush2.bf16.msra.mxu0 0
    %3242 = vmatprep.subr.bf16.mxu0 0
    %3243 = vmatpush2.bf16.msra.mxu0 0
    %3244 = vmatprep.subr.bf16.mxu0 0
    %3245 = vmatpush2.bf16.msra.mxu0 0
    %3246 = vmatprep.mubr.bf16.mxu0 0
    %3247 = vmatmul.mubr.bf16.gmra.mxu0 %v3044
    %v3248 = vpop.f32.mrf.mxu0
    %v3249 = vadd.f32 %v3161, %v3248
    %v3250 = vpop.f32.mrf.mxu0
    %v3251 = vpop.f32.mrf.mxu0
    %v3252 = vpop.f32.mrf.mxu0
    %3253 = vdwg.mxu0
    %v3254 = vld [vmem:[#allocation7 + $0xe] sm:$0x1]
    %v3256 = vlaneseq
    %v3257 = vshrl.u32 %v3256, 7
    %v3258 = vsub.s32 0, %v3257
    %v3259 = vrot.slane %v3254, %v3258
    %v3261 = vadd.f32 %v3249, %v3259
    %v3262 = vmax.f32 %v3261, 0.0
    %v3263 = vpack.c.bf16 %v3262, %v3262
    %v3264 = vld [vmem:[#allocation5 + $0xc08] sm:$0xf]
    %v3265 = vld [vmem:[#allocation5 + $0xc18] sm:$0xf]
    %v3266 = vld [vmem:[#allocation5 + $0xc28] sm:$0xf]
    %v3267 = vld [vmem:[#allocation5 + $0xc38] sm:$0xf]
    %v3268 = vld [vmem:[#allocation5 + $0xc48] sm:$0xf]
    %v3269 = vld [vmem:[#allocation5 + $0xc58] sm:$0xf]
    %v3270 = vld [vmem:[#allocation5 + $0xc68] sm:$0xf]
    %v3271 = vld [vmem:[#allocation5 + $0xc78] sm:$0xf]
    %v3272 = vld [vmem:[#allocation5 + $0xc88] sm:$0xf]
    %v3273 = vld [vmem:[#allocation5 + $0xc98] sm:$0xf]
    %v3274 = vld [vmem:[#allocation5 + $0xca8] sm:$0xf]
    %v3275 = vld [vmem:[#allocation5 + $0xcb8] sm:$0xf]
    %v3276 = vld [vmem:[#allocation5 + $0xcc8] sm:$0xf]
    %v3277 = vld [vmem:[#allocation5 + $0xcd8] sm:$0xf]
    %v3278 = vld [vmem:[#allocation5 + $0xce8] sm:$0xf]
    %v3279 = vld [vmem:[#allocation5 + $0xcf8] sm:$0xf]
    %v3280 = vld [vmem:[#allocation7 + $0xf] sm:$0x1]
    %v3282 = vlaneseq
    %v3283 = vshrl.u32 %v3282, 7
    %v3284 = vsub.s32 0, %v3283
    %v3285 = vrot.slane %v3280, %v3284
    %v3303 = vunpack.c.l.b16 %v3264
    %v3304 = vunpack.c.l.b16 %v3265
    %v3305 = vunpack.c.l.b16 %v3266
    %v3306 = vunpack.c.l.b16 %v3267
    %v3307 = vunpack.c.l.b16 %v3268
    %v3308 = vunpack.c.l.b16 %v3269
    %v3309 = vunpack.c.l.b16 %v3270
    %v3310 = vunpack.c.l.b16 %v3271
    %v3311 = vunpack.c.l.b16 %v3272
    %v3312 = vunpack.c.l.b16 %v3273
    %v3313 = vunpack.c.l.b16 %v3274
    %v3314 = vunpack.c.l.b16 %v3275
    %v3315 = vunpack.c.l.b16 %v3276
    %v3316 = vunpack.c.l.b16 %v3277
    %v3317 = vunpack.c.l.b16 %v3278
    %v3318 = vunpack.c.l.b16 %v3279
    %v3319 = vpack.c.b16 %v3304, %v3303
    %v3320 = vpack.c.b16 %v3306, %v3305
    %v3321 = vpack.c.b16 %v3308, %v3307
    %v3322 = vpack.c.b16 %v3310, %v3309
    %v3323 = vpack.c.b16 %v3312, %v3311
    %v3324 = vpack.c.b16 %v3314, %v3313
    %v3325 = vpack.c.b16 %v3316, %v3315
    %v3326 = vpack.c.b16 %v3318, %v3317
    %3335 = vmatprep.subr.bf16.mxu0 0
    %3336 = vmatpush1.bf16.msra.mxu0 %v3326
    %3337 = vmatprep.subr.bf16.mxu0 0
    %3338 = vmatpush1.bf16.msra.mxu0 %v3325
    %3339 = vmatprep.subr.bf16.mxu0 0
    %3340 = vmatpush1.bf16.msra.mxu0 %v3324
    %3341 = vmatprep.subr.bf16.mxu0 0
    %3342 = vmatpush1.bf16.msra.mxu0 %v3323
    %3343 = vmatprep.subr.bf16.mxu0 0
    %3344 = vmatpush1.bf16.msra.mxu0 %v3322
    %3345 = vmatprep.subr.bf16.mxu0 0
    %3346 = vmatpush1.bf16.msra.mxu0 %v3321
    %3347 = vmatprep.subr.bf16.mxu0 0
    %3348 = vmatpush1.bf16.msra.mxu0 %v3320
    %3349 = vmatprep.subr.bf16.mxu0 0
    %3350 = vmatpush1.bf16.msra.mxu0 %v3319
    %3351 = vmatprep.subr.bf16.mxu0 0
    %3352 = vmatpush2.bf16.msra.mxu0 0
    %3353 = vmatprep.subr.bf16.mxu0 0
    %3354 = vmatpush2.bf16.msra.mxu0 0
    %3355 = vmatprep.subr.bf16.mxu0 0
    %3356 = vmatpush2.bf16.msra.mxu0 0
    %3357 = vmatprep.subr.bf16.mxu0 0
    %3358 = vmatpush2.bf16.msra.mxu0 0
    %3359 = vmatprep.subr.bf16.mxu0 0
    %3360 = vmatpush2.bf16.msra.mxu0 0
    %3361 = vmatprep.subr.bf16.mxu0 0
    %3362 = vmatpush2.bf16.msra.mxu0 0
    %3363 = vmatprep.subr.bf16.mxu0 0
    %3364 = vmatpush2.bf16.msra.mxu0 0
    %3365 = vmatprep.subr.bf16.mxu0 0
    %3366 = vmatpush2.bf16.msra.mxu0 0
    %3367 = vmatprep.mubr.bf16.mxu0 0
    %3368 = vmatmul.mubr.bf16.gmra.mxu0 %v3263
    %v3369 = vpop.f32.mrf.mxu0
    %v3370 = vadd.f32 %v3285, %v3369
    %v3371 = vpop.f32.mrf.mxu0
    %v3372 = vpop.f32.mrf.mxu0
    %v3373 = vpop.f32.mrf.mxu0
    %3374 = vdwg.mxu0
    %3375 = vmax.xlane.f32.xlu0 %v3370
    %v3376 = vpop.xlane.xlu0 %3375
    %v3377 = vsub.f32 %v3370, %v3376
    %v3378 = vmul.f32 %v3377, 1.442695
    %v3379 = vpow.pop %v3378
    %3380 = vadd.xlane.f32.xlu0 %v3379
    %v3381 = vpop.xlane.xlu0 %3380
    %v3382 = vrcp.pop %v3381
    %v3383 = vmul.f32 %v3379, %v3382
    %3384 = vst [vmem:[#allocation8] sm:$0xff] %v3383
    // Predicated region
    $region26: #{tpu_custom_call.1} parent=1 // pred_check
      _
    $region27: #{tpu_custom_call.1} parent=1 // pred_check_branch
      %3386 = sbr.rel (0) target = $region29
    $region28: #{tpu_custom_call.1} parent=1 // pred_region
      %s3388 = ssub.s32 128, 128
      %3389 = vsyncadd [#allocation4], %s3388
      %s3391 = sshll.u32 [#allocation8], 4
      %s3392 = int_to_ptr.vmem [resolvable:$true] %s3391
      %3394 = dma.vmem_to_hbm [thread:$0]  %s3392, 128, %s3, [#allocation4]
    $region29: #{tpu_custom_call.1} parent=1 // pred_fallthru
      _
    // Predicated region
    $region30: #{tpu_custom_call.1} parent=1 // pred_check
      _
    $region31: #{tpu_custom_call.1} parent=1 // pred_check_branch
      %3396 = sbr.rel (0) target = $region33
    $region32: #{tpu_custom_call.1} parent=1 // pred_region
      %3397 = dma.done [#allocation4], 128
    $region33: #{tpu_custom_call.1} parent=1 // pred_fallthru
      _
    %3398 = vsyncpa [#allocation3], 1
    %3399 = vsyncpa [#allocation6], 1
    %3400 = vsyncpa [#allocation4], 1

</llo_original>
